<compile_context>
chip_gen: v5e
topology: v5e:2x2
jax: 0.10.0
libtpu: 0.0.40
codegen_flags: <defaults>
</compile_context>

<pallas_src>
import math
import functools

import jax
import jax.numpy as jnp
from jax.experimental import pallas as pl
from jax.experimental.pallas import tpu as pltpu


# -----------------------------------------------------------------------------
# In-kernel helpers (traced inside the Pallas kernel body)
# -----------------------------------------------------------------------------
def _layernorm(x, gamma, beta, eps=1e-5):
    mu = jnp.mean(x, axis=-1, keepdims=True)
    var = jnp.mean((x - mu) ** 2, axis=-1, keepdims=True)
    return (x - mu) * jax.lax.rsqrt(var + eps) * gamma + beta


def _mm(a, w):
    """(BB, R, K) @ (K, N) -> (BB, R, N).  bf16 operands, f32 accumulation.
    Leading dims are flattened so the MXU sees one large 2-D matmul."""
    bb, r, k = a.shape
    out = jnp.dot(a.reshape(bb * r, k), w, preferred_element_type=jnp.float32)
    return out.reshape(bb, r, w.shape[1])


def _attention(q, k, v, nhead, exact):
    """q: (BB, T, D) f32, k/v: (BB, S, D) f32.  The softmax scale is pre-folded
    into the Q projection.  Returns (ctx (BB, T, D) f32, probs (BB, H, T, S) f32)."""
    bb, t, d = q.shape
    s_len = k.shape[1]
    dh = d // nhead

    def heads(x, n):  # (BB, n, D) -> (BB*H, n, dh): single leading batch axis for the einsums
        return x.reshape(bb, n, nhead, dh).transpose(0, 2, 1, 3).reshape(bb * nhead, n, dh)

    qh = heads(q, t).astype(jnp.bfloat16)
    kh = heads(k, s_len).astype(jnp.bfloat16)
    vh = heads(v, s_len).astype(jnp.bfloat16)

    s = jnp.einsum('bqd,bkd->bqk', qh, kh, preferred_element_type=jnp.float32)
    s = s - jnp.max(s, axis=-1, keepdims=True)
    e = jnp.exp(s)
    denom = jnp.sum(e, axis=-1, keepdims=True)
    if exact:
        p = e / denom                                        # exact: probs are returned
    else:
        p = e * pl.reciprocal(denom, approx=True)            # EUP slot, nearly free
    ctx = jnp.einsum('bqk,bkd->bqd', p.astype(jnp.bfloat16), vh,
                     preferred_element_type=jnp.float32)     # (BB*H, T, dh)
    ctx = ctx.reshape(bb, nhead, t, dh).transpose(0, 2, 1, 3).reshape(bb, t, d)
    return ctx, p.reshape(bb, nhead, t, s_len)


# -----------------------------------------------------------------------------
# Fused decoder-stack kernel (grid = (batch_block, layer))
# -----------------------------------------------------------------------------
def _decoder_stack_kernel(nhead, apply_final_norm, return_attn,
                          x_ref, mem_ref, wd_ref, w2_ref, vec_ref, gf_ref, bfin_ref,
                          out_ref, *maybe_attn_ref):
    attn_ref = maybe_attn_ref[0] if return_attn else None

    l = pl.program_id(1)
    last = pl.num_programs(1) - 1

    D = x_ref.shape[-1]
    F = w2_ref.shape[1]

    # Layer 0: seed the resident activation carry (the out block index is constant across
    # the layer axis, so it stays in VMEM and acts as the carry between layers).
    @pl.when(l == 0)
    def _():
        out_ref[...] = x_ref[...]

    x = out_ref[...]                       # (BB, T, D) float32 carry
    m = mem_ref[...]                       # (BB, S, D) bfloat16

    # --- per-layer packed weight slabs (static ref-window loads) ---
    w_qkv = wd_ref[0, :, 0:3 * D]          # self-attn fused QKV (softmax scale folded into Q)
    w_sao = wd_ref[0, :, 3 * D:4 * D]      # self-attn output proj
    w_caq = wd_ref[0, :, 4 * D:5 * D]      # cross-attn Q proj (scaled)
    w_ckv = wd_ref[0, :, 5 * D:7 * D]      # cross-attn fused KV proj
    w_cao = wd_ref[0, :, 7 * D:8 * D]      # cross-attn output proj
    w_ff1 = wd_ref[0, :, 8 * D:8 * D + F]  # FF up-proj
    w_ff2 = w2_ref[0]                      # FF down-proj (F, D)

    b_qkv = vec_ref[0, :, 0:3 * D]
    b_sao = vec_ref[0, :, 3 * D:4 * D]
    b_caq = vec_ref[0, :, 4 * D:5 * D]
    b_ckv = vec_ref[0, :, 5 * D:7 * D]
    b_cao = vec_ref[0, :, 7 * D:8 * D]
    b_ff1 = vec_ref[0, :, 8 * D:8 * D + F]
    b_ff2 = vec_ref[0, :, 8 * D + F:9 * D + F]
    g1 = vec_ref[0, :, 9 * D + F:10 * D + F]
    be1 = vec_ref[0, :, 10 * D + F:11 * D + F]
    g2 = vec_ref[0, :, 11 * D + F:12 * D + F]
    be2 = vec_ref[0, :, 12 * D + F:13 * D + F]
    g3 = vec_ref[0, :, 13 * D + F:14 * D + F]
    be3 = vec_ref[0, :, 14 * D + F:15 * D + F]

    # --- self-attention (fused QKV) + residual + LN1 ---
    qkv = _mm(x.astype(jnp.bfloat16), w_qkv) + b_qkv                      # (BB, T, 3D) f32
    ctx, _ = _attention(qkv[..., 0:D], qkv[..., D:2 * D], qkv[..., 2 * D:3 * D],
                        nhead, exact=False)
    sa = _mm(ctx.astype(jnp.bfloat16), w_sao) + b_sao
    x = _layernorm(x + sa, g1, be1)

    # --- cross-attention (Q on x, fused KV on memory) + residual + LN2 ---
    qc = _mm(x.astype(jnp.bfloat16), w_caq) + b_caq                       # (BB, T, D)
    kvc = _mm(m, w_ckv) + b_ckv                                           # (BB, S, 2D)
    ctx_c, p_c = _attention(qc, kvc[..., 0:D], kvc[..., D:2 * D], nhead, exact=True)
    ca = _mm(ctx_c.astype(jnp.bfloat16), w_cao) + b_cao
    x = _layernorm(x + ca, g2, be2)

    # --- feed-forward + residual + LN3 ---
    h = jnp.maximum(_mm(x.astype(jnp.bfloat16), w_ff1) + b_ff1, 0.0)
    f = _mm(h.astype(jnp.bfloat16), w_ff2) + b_ff2
    x = _layernorm(x + f, g3, be3)

    # --- exactly one store per layer; the final norm is fused into the last store ---
    @pl.when(l < last)
    def _():
        out_ref[...] = x

    @pl.when(l == last)
    def _():
        if apply_final_norm:                      # static (trace-time) flag
            out_ref[...] = _layernorm(x, gf_ref[...], bfin_ref[...])
        else:
            out_ref[...] = x
        if return_attn:                           # static (trace-time) flag
            attn_ref[...] = jnp.sum(p_c, axis=1) * (1.0 / nhead)   # head average


# -----------------------------------------------------------------------------
# Host-side parameter packing (one-time): scale folding + slab concatenation
# -----------------------------------------------------------------------------
_PARAM_ORDER = ("sa_wqkv", "sa_bqkv", "sa_wo", "sa_bo",
                "ca_wq", "ca_bq", "ca_wkv", "ca_bkv", "ca_wo", "ca_bo",
                "w1", "b1", "w2", "b2",
                "g1", "be1", "g2", "be2", "g3", "be3")


def _pack_params(sp, nhead):
    L, D, _ = sp["sa_wqkv"].shape
    F = sp["w1"].shape[-1]
    dh = D // nhead
    scale = 1.0 / math.sqrt(dh)

    # Fold the softmax scale into the Q projections (weights and biases) -> no per-score mul.
    sa_wqkv = sp["sa_wqkv"].at[:, :, :D].multiply(scale)
    sa_bqkv = sp["sa_bqkv"].at[:, :, :D].multiply(scale)
    ca_wq = sp["ca_wq"] * scale
    ca_bq = sp["ca_bq"] * scale

    # D-leading matrices -> one bf16 slab (L, D, 8D+F); FF down-proj separate (L, F, D).
    wd = jnp.concatenate([sa_wqkv, sp["sa_wo"], ca_wq, sp["ca_wkv"], sp["ca_wo"], sp["w1"]],
                         axis=-1).astype(jnp.bfloat16)
    w2 = sp["w2"].astype(jnp.bfloat16)
    # All biases / LayerNorm params -> one f32 slab (L, 1, 15D+F).
    vec = jnp.concatenate([sa_bqkv, sp["sa_bo"], ca_bq, sp["ca_bkv"], sp["ca_bo"],
                           sp["b1"], sp["b2"], sp["g1"], sp["be1"], sp["g2"], sp["be2"],
                           sp["g3"], sp["be3"]], axis=-1).astype(jnp.float32)
    return wd, w2, vec, L, D, F


# -----------------------------------------------------------------------------
# Wrapper
# -----------------------------------------------------------------------------
def transformer_decoder_forward(tgt, memory, stacked_params, nhead,
                                final_norm_params=None, return_attn=True,
                                batch_block=None):
    """Mirrors TransformerDecoder.forward (masks unsupported -> None, eval mode)."""
    B, T, D = tgt.shape
    S = memory.shape[1]
    H = nhead

    wd, w2, vec, L, D2, F = _pack_params(stacked_params, nhead)
    assert D2 == D

    apply_final_norm = final_norm_params is not None
    if apply_final_norm:
        gf, bfin = final_norm_params
        gf = jnp.asarray(gf, jnp.float32).reshape(1, D)
        bfin = jnp.asarray(bfin, jnp.float32).reshape(1, D)
    else:
        gf = jnp.ones((1, D), jnp.float32)
        bfin = jnp.zeros((1, D), jnp.float32)

    tgt_f32 = tgt.astype(jnp.float32)        # carried in f32 for accuracy
    mem_bf16 = memory.astype(jnp.bfloat16)   # only used as bf16 matmul operand

    # --- VMEM budget (generation-aware) and batch-block size ---
    try:
        info = pltpu.get_tpu_info()
        vmem_cap = int(getattr(info, "vmem_capacity_bytes", 64 << 20))
    except Exception:
        vmem_cap = 64 << 20
    vmem_limit = int(max(32 << 20, min(int(0.75 * vmem_cap), vmem_cap - (8 << 20))))

    # per-layer weight bytes (double-buffered by the pipeline) and rough f32 live bytes per row
    layer_bytes = (wd.shape[1] * wd.shape[2] + w2.shape[1] * w2.shape[2]) * 2 + vec.shape[2] * 4
    per_row = 4 * (4 * T * D + 3 * T * D + 2 * S * D + 3 * H * T * S + T * F + T * S) + 2 * S * D

    if batch_block is None:
        avail = vmem_limit - 3 * layer_bytes - (4 << 20)
        bb = max(1, min(B, avail // max(per_row, 1)))
        if B >= 2:          # keep >= 2 batch blocks so both v7x TensorCores get work
            bb = min(bb, max(1, B // 2))
    else:
        bb = max(1, min(B, batch_block))
    while B % bb != 0:      # blocks must evenly tile the batch
        bb -= 1
    nb = B // bb

    in_specs = [
        pl.BlockSpec((bb, T, D), lambda b, l: (b, 0, 0)),              # tgt (once per batch block)
        pl.BlockSpec((bb, S, D), lambda b, l: (b, 0, 0)),              # memory (bf16)
        pl.BlockSpec((1, D, 8 * D + F), lambda b, l: (l, 0, 0)),       # packed matrices (bf16)
        pl.BlockSpec((1, F, D), lambda b, l: (l, 0, 0)),               # FF down-proj (bf16)
        pl.BlockSpec((1, 1, 15 * D + F), lambda b, l: (l, 0, 0)),      # packed biases/LN (f32)
        pl.BlockSpec((1, D), lambda b, l: (0, 0)),                     # final-norm gamma
        pl.BlockSpec((1, D), lambda b, l: (0, 0)),                     # final-norm beta
    ]
    out_shape = [jax.ShapeDtypeStruct((B, T, D), jnp.float32)]
    out_specs = [pl.BlockSpec((bb, T, D), lambda b, l: (b, 0, 0))]
    if return_attn:
        out_shape.append(jax.ShapeDtypeStruct((B, T, S), jnp.float32))
        out_specs.append(pl.BlockSpec((bb, T, S), lambda b, l: (b, 0, 0)))

    kernel = functools.partial(_decoder_stack_kernel, nhead, apply_final_norm, return_attn)
    outs = pl.pallas_call(
        kernel,
        out_shape=out_shape,
        grid=(nb, L),
        in_specs=in_specs,
        out_specs=out_specs,
        compiler_params=pltpu.CompilerParams(
            dimension_semantics=("parallel", "arbitrary"),
            vmem_limit_bytes=vmem_limit),
    )(tgt_f32, mem_bf16, wd, w2, vec, gf, bfin)

    out = outs[0]
    attn = outs[1] if return_attn else None
    return out, attn


# -----------------------------------------------------------------------------
# Deterministic parameter init (weights stored pre-transposed: kernel computes x @ W)
# -----------------------------------------------------------------------------
def init_stacked_params(key, num_layers, d_model, dim_ff, layers_share_weights=False):
    D, F = d_model, dim_ff

    def one_layer(k):
        ks = jax.random.split(k, 7)
        w = lambda kk, shape: jax.random.normal(kk, shape, jnp.float32) * 0.02
        return dict(
            sa_wqkv=w(ks[0], (D, 3 * D)), sa_bqkv=jnp.zeros((1, 3 * D), jnp.float32),
            sa_wo=w(ks[1], (D, D)),       sa_bo=jnp.zeros((1, D), jnp.float32),
            ca_wq=w(ks[2], (D, D)),       ca_bq=jnp.zeros((1, D), jnp.float32),
            ca_wkv=w(ks[3], (D, 2 * D)),  ca_bkv=jnp.zeros((1, 2 * D), jnp.float32),
            ca_wo=w(ks[4], (D, D)),       ca_bo=jnp.zeros((1, D), jnp.float32),
            w1=w(ks[5], (D, F)),          b1=jnp.zeros((1, F), jnp.float32),
            w2=w(ks[6], (F, D)),          b2=jnp.zeros((1, D), jnp.float32),
            g1=jnp.ones((1, D), jnp.float32), be1=jnp.zeros((1, D), jnp.float32),
            g2=jnp.ones((1, D), jnp.float32), be2=jnp.zeros((1, D), jnp.float32),
            g3=jnp.ones((1, D), jnp.float32), be3=jnp.zeros((1, D), jnp.float32),
        )

    if layers_share_weights:
        layers = [one_layer(key)] * num_layers
    else:
        layers = [one_layer(k) for k in jax.random.split(key, num_layers)]

    # Stack along a leading 'layer' axis -> streamed one layer at a time in-kernel.
    return {name: jnp.stack([lp[name] for lp in layers], axis=0) for name in _PARAM_ORDER}


# -----------------------------------------------------------------------------
if __name__ == "__main__":
    B, T_TGT, S_MEM = 2, 8, 16
    D_MODEL, NHEAD, DIM_FF = 32, 4, 64
    NUM_LAYERS = 2

    root = jax.random.PRNGKey(0)
    k_tgt, k_mem, k_layers = jax.random.split(root, 3)

    tgt = jax.random.normal(k_tgt, (B, T_TGT, D_MODEL), dtype=jnp.float32)
    memory = jax.random.normal(k_mem, (B, S_MEM, D_MODEL), dtype=jnp.float32)

    params = init_stacked_params(k_layers, NUM_LAYERS, D_MODEL, DIM_FF,
                                 layers_share_weights=False)
    final_norm = (jnp.ones((1, D_MODEL), jnp.float32),
                  jnp.zeros((1, D_MODEL), jnp.float32))

    out, attn = transformer_decoder_forward(tgt, memory, params, NHEAD,
                                            final_norm_params=final_norm,
                                            return_attn=True)
    out = jax.block_until_ready(out)
    attn = jax.block_until_ready(attn)

    assert out.shape == (B, T_TGT, D_MODEL)
    assert attn.shape == (B, T_TGT, S_MEM)
    assert bool(jnp.all(jnp.isfinite(out))) and bool(jnp.all(jnp.isfinite(attn)))
    # cross-attn probabilities (exact softmax) should sum to ~1 after head averaging
    assert bool(jnp.all(jnp.abs(jnp.sum(attn, axis=-1) - 1.0) < 1e-3))
    print("KERNEL_OK")
</pallas_src>

<mosaic_0001>
module attributes {stable_mosaic.version = 11 : i64} {
  func.func @_decoder_stack_kernel(%arg0: i32, %arg1: i32, %arg2: memref<1x8x32xf32, #tpu.memory_space<vmem>>, %arg3: memref<1x16x32xbf16, #tpu.memory_space<vmem>>, %arg4: memref<1x32x320xbf16, #tpu.memory_space<vmem>>, %arg5: memref<1x64x32xbf16, #tpu.memory_space<vmem>>, %arg6: memref<1x1x544xf32, #tpu.memory_space<vmem>>, %arg7: memref<1x32xf32, #tpu.memory_space<vmem>>, %arg8: memref<1x32xf32, #tpu.memory_space<vmem>>, %arg9: memref<1x8x32xf32, #tpu.memory_space<vmem>>, %arg10: memref<1x8x16xf32, #tpu.memory_space<vmem>>) attributes {dimension_semantics = [#tpu.dimension_semantics<parallel>, #tpu.dimension_semantics<arbitrary>], iteration_bounds = array<i64: 2, 2>, scalar_prefetch = 0 : i64, scratch_operands = 0 : i64, tpu.core_type = #tpu.core_type<tc>, window_params = [{transform_indices = @transform_0, window_bounds = array<i64: 1, 8, 32>}, {transform_indices = @transform_1, window_bounds = array<i64: 1, 16, 32>}, {transform_indices = @transform_2, window_bounds = array<i64: 1, 32, 320>}, {transform_indices = @transform_3, window_bounds = array<i64: 1, 64, 32>}, {transform_indices = @transform_4, window_bounds = array<i64: 1, 1, 544>}, {pipeline_mode = #tpu.pipeline_mode<synchronous>, transform_indices = @transform_5, window_bounds = array<i64: 1, 32>}, {pipeline_mode = #tpu.pipeline_mode<synchronous>, transform_indices = @transform_6, window_bounds = array<i64: 1, 32>}, {transform_indices = @transform_7, window_bounds = array<i64: 1, 8, 32>}, {transform_indices = @transform_8, window_bounds = array<i64: 1, 8, 16>}]} {
    %c0_i32 = arith.constant 0 : i32
    %0 = arith.cmpi eq, %arg1, %c0_i32 : i32
    %1 = arith.extui %0 : i1 to i32
    %c0_i32_0 = arith.constant 0 : i32
    %2 = arith.cmpi ne, %1, %c0_i32_0 : i32
    scf.if %2 {
      %c0_87 = arith.constant 0 : index
      %c0_88 = arith.constant 0 : index
      %c0_89 = arith.constant 0 : index
      %237 = vector.load %arg2[%c0_87, %c0_88, %c0_89] : memref<1x8x32xf32, #tpu.memory_space<vmem>>, vector<1x8x32xf32>
      %c0_90 = arith.constant 0 : index
      %c0_91 = arith.constant 0 : index
      %c0_92 = arith.constant 0 : index
      %238 = vector.load %arg9[%c0_90, %c0_91, %c0_92] : memref<1x8x32xf32, #tpu.memory_space<vmem>>, vector<1x8x32xf32>
      tpu.vector_store %arg9[%c0_90, %c0_91, %c0_92], %237 {strides = array<i32>} : memref<1x8x32xf32, #tpu.memory_space<vmem>>, vector<1x8x32xf32>,
    } else {
    }
    %c0 = arith.constant 0 : index
    %c0_1 = arith.constant 0 : index
    %c0_2 = arith.constant 0 : index
    %3 = vector.load %arg9[%c0, %c0_1, %c0_2] : memref<1x8x32xf32, #tpu.memory_space<vmem>>, vector<1x8x32xf32>
    %c0_3 = arith.constant 0 : index
    %c0_4 = arith.constant 0 : index
    %c0_5 = arith.constant 0 : index
    %4 = vector.load %arg3[%c0_3, %c0_4, %c0_5] : memref<1x16x32xbf16, #tpu.memory_space<vmem>>, vector<1x16x32xbf16>
    %c0_6 = arith.constant 0 : index
    %c0_7 = arith.constant 0 : index
    %c0_8 = arith.constant 0 : index
    %5 = vector.load %arg4[%c0_6, %c0_7, %c0_8] : memref<1x32x320xbf16, #tpu.memory_space<vmem>>, vector<1x32x96xbf16>
    %6 = vector.shape_cast %5 : vector<1x32x96xbf16> to vector<32x96xbf16>
    %c0_9 = arith.constant 0 : index
    %c0_10 = arith.constant 0 : index
    %c96 = arith.constant 96 : index
    %7 = vector.load %arg4[%c0_9, %c0_10, %c96] : memref<1x32x320xbf16, #tpu.memory_space<vmem>>, vector<1x32x32xbf16>
    %8 = vector.shape_cast %7 : vector<1x32x32xbf16> to vector<32x32xbf16>
    %c0_11 = arith.constant 0 : index
    %c0_12 = arith.constant 0 : index
    %c128 = arith.constant 128 : index
    %9 = vector.load %arg4[%c0_11, %c0_12, %c128] : memref<1x32x320xbf16, #tpu.memory_space<vmem>>, vector<1x32x32xbf16>
    %10 = vector.shape_cast %9 : vector<1x32x32xbf16> to vector<32x32xbf16>
    %c0_13 = arith.constant 0 : index
    %c0_14 = arith.constant 0 : index
    %c160 = arith.constant 160 : index
    %11 = vector.load %arg4[%c0_13, %c0_14, %c160] : memref<1x32x320xbf16, #tpu.memory_space<vmem>>, vector<1x32x64xbf16>
    %12 = vector.shape_cast %11 : vector<1x32x64xbf16> to vector<32x64xbf16>
    %c0_15 = arith.constant 0 : index
    %c0_16 = arith.constant 0 : index
    %c224 = arith.constant 224 : index
    %13 = vector.load %arg4[%c0_15, %c0_16, %c224] : memref<1x32x320xbf16, #tpu.memory_space<vmem>>, vector<1x32x32xbf16>
    %14 = vector.shape_cast %13 : vector<1x32x32xbf16> to vector<32x32xbf16>
    %c0_17 = arith.constant 0 : index
    %c0_18 = arith.constant 0 : index
    %c256 = arith.constant 256 : index
    %15 = vector.load %arg4[%c0_17, %c0_18, %c256] : memref<1x32x320xbf16, #tpu.memory_space<vmem>>, vector<1x32x64xbf16>
    %16 = vector.shape_cast %15 : vector<1x32x64xbf16> to vector<32x64xbf16>
    %c0_19 = arith.constant 0 : index
    %c0_20 = arith.constant 0 : index
    %c0_21 = arith.constant 0 : index
    %17 = vector.load %arg5[%c0_19, %c0_20, %c0_21] : memref<1x64x32xbf16, #tpu.memory_space<vmem>>, vector<1x64x32xbf16>
    %18 = vector.shape_cast %17 : vector<1x64x32xbf16> to vector<64x32xbf16>
    %c0_22 = arith.constant 0 : index
    %c0_23 = arith.constant 0 : index
    %c0_24 = arith.constant 0 : index
    %19 = vector.load %arg6[%c0_22, %c0_23, %c0_24] : memref<1x1x544xf32, #tpu.memory_space<vmem>>, vector<1x1x96xf32>
    %20 = vector.shape_cast %19 : vector<1x1x96xf32> to vector<1x96xf32>
    %c0_25 = arith.constant 0 : index
    %c0_26 = arith.constant 0 : index
    %c96_27 = arith.constant 96 : index
    %21 = vector.load %arg6[%c0_25, %c0_26, %c96_27] : memref<1x1x544xf32, #tpu.memory_space<vmem>>, vector<1x1x32xf32>
    %22 = vector.shape_cast %21 : vector<1x1x32xf32> to vector<1x32xf32>
    %c0_28 = arith.constant 0 : index
    %c0_29 = arith.constant 0 : index
    %c128_30 = arith.constant 128 : index
    %23 = vector.load %arg6[%c0_28, %c0_29, %c128_30] : memref<1x1x544xf32, #tpu.memory_space<vmem>>, vector<1x1x32xf32>
    %24 = vector.shape_cast %23 : vector<1x1x32xf32> to vector<1x32xf32>
    %c0_31 = arith.constant 0 : index
    %c0_32 = arith.constant 0 : index
    %c160_33 = arith.constant 160 : index
    %25 = vector.load %arg6[%c0_31, %c0_32, %c160_33] : memref<1x1x544xf32, #tpu.memory_space<vmem>>, vector<1x1x64xf32>
    %26 = vector.shape_cast %25 : vector<1x1x64xf32> to vector<1x64xf32>
    %c0_34 = arith.constant 0 : index
    %c0_35 = arith.constant 0 : index
    %c224_36 = arith.constant 224 : index
    %27 = vector.load %arg6[%c0_34, %c0_35, %c224_36] : memref<1x1x544xf32, #tpu.memory_space<vmem>>, vector<1x1x32xf32>
    %28 = vector.shape_cast %27 : vector<1x1x32xf32> to vector<1x32xf32>
    %c0_37 = arith.constant 0 : index
    %c0_38 = arith.constant 0 : index
    %c256_39 = arith.constant 256 : index
    %29 = vector.load %arg6[%c0_37, %c0_38, %c256_39] : memref<1x1x544xf32, #tpu.memory_space<vmem>>, vector<1x1x64xf32>
    %30 = vector.shape_cast %29 : vector<1x1x64xf32> to vector<1x64xf32>
    %c0_40 = arith.constant 0 : index
    %c0_41 = arith.constant 0 : index
    %c320 = arith.constant 320 : index
    %31 = vector.load %arg6[%c0_40, %c0_41, %c320] : memref<1x1x544xf32, #tpu.memory_space<vmem>>, vector<1x1x32xf32>
    %32 = vector.shape_cast %31 : vector<1x1x32xf32> to vector<1x32xf32>
    %c0_42 = arith.constant 0 : index
    %c0_43 = arith.constant 0 : index
    %c352 = arith.constant 352 : index
    %33 = vector.load %arg6[%c0_42, %c0_43, %c352] : memref<1x1x544xf32, #tpu.memory_space<vmem>>, vector<1x1x32xf32>
    %34 = vector.shape_cast %33 : vector<1x1x32xf32> to vector<1x32xf32>
    %c0_44 = arith.constant 0 : index
    %c0_45 = arith.constant 0 : index
    %c384 = arith.constant 384 : index
    %35 = vector.load %arg6[%c0_44, %c0_45, %c384] : memref<1x1x544xf32, #tpu.memory_space<vmem>>, vector<1x1x32xf32>
    %36 = vector.shape_cast %35 : vector<1x1x32xf32> to vector<1x32xf32>
    %c0_46 = arith.constant 0 : index
    %c0_47 = arith.constant 0 : index
    %c416 = arith.constant 416 : index
    %37 = vector.load %arg6[%c0_46, %c0_47, %c416] : memref<1x1x544xf32, #tpu.memory_space<vmem>>, vector<1x1x32xf32>
    %38 = vector.shape_cast %37 : vector<1x1x32xf32> to vector<1x32xf32>
    %c0_48 = arith.constant 0 : index
    %c0_49 = arith.constant 0 : index
    %c448 = arith.constant 448 : index
    %39 = vector.load %arg6[%c0_48, %c0_49, %c448] : memref<1x1x544xf32, #tpu.memory_space<vmem>>, vector<1x1x32xf32>
    %40 = vector.shape_cast %39 : vector<1x1x32xf32> to vector<1x32xf32>
    %c0_50 = arith.constant 0 : index
    %c0_51 = arith.constant 0 : index
    %c480 = arith.constant 480 : index
    %41 = vector.load %arg6[%c0_50, %c0_51, %c480] : memref<1x1x544xf32, #tpu.memory_space<vmem>>, vector<1x1x32xf32>
    %42 = vector.shape_cast %41 : vector<1x1x32xf32> to vector<1x32xf32>
    %c0_52 = arith.constant 0 : index
    %c0_53 = arith.constant 0 : index
    %c512 = arith.constant 512 : index
    %43 = vector.load %arg6[%c0_52, %c0_53, %c512] : memref<1x1x544xf32, #tpu.memory_space<vmem>>, vector<1x1x32xf32>
    %44 = vector.shape_cast %43 : vector<1x1x32xf32> to vector<1x32xf32>
    %45 = arith.truncf %3 : vector<1x8x32xf32> to vector<1x8x32xbf16>
    %46 = vector.shape_cast %45 : vector<1x8x32xbf16> to vector<8x32xbf16>
    %cst = arith.constant dense<0.000000e+00> : vector<8x96xf32>
    %47 = tpu.matmul %46, %6, %cst {dimension_numbers = #tpu.dot_dimension_numbers<[1], [0], [0], [1], [0, 0, 1, 1], [], []>} : vector<8x32xbf16>, vector<32x96xbf16>, vector<8x96xf32> -> vector<8x96xf32>
    %48 = vector.shape_cast %47 : vector<8x96xf32> to vector<1x8x96xf32>
    %49 = vector.shape_cast %20 : vector<1x96xf32> to vector<1x1x96xf32>
    %50 = vector.broadcast %49 : vector<1x1x96xf32> to vector<1x8x96xf32>
    %51 = arith.addf %48, %50 : vector<1x8x96xf32>
    %52 = vector.extract_strided_slice %51 {offsets = [0, 0, 0], sizes = [1, 8, 32], strides = [1, 1, 1]} : vector<1x8x96xf32> to vector<1x8x32xf32>
    %53 = vector.extract_strided_slice %51 {offsets = [0, 0, 32], sizes = [1, 8, 32], strides = [1, 1, 1]} : vector<1x8x96xf32> to vector<1x8x32xf32>
    %54 = vector.extract_strided_slice %51 {offsets = [0, 0, 64], sizes = [1, 8, 32], strides = [1, 1, 1]} : vector<1x8x96xf32> to vector<1x8x32xf32>
    %55 = vector.shape_cast %52 : vector<1x8x32xf32> to vector<1x8x4x8xf32>
    %56 = tpu.transpose %55, [0, 2, 1, 3] : vector<1x8x4x8xf32> -> vector<1x4x8x8xf32>
    %57 = vector.shape_cast %56 : vector<1x4x8x8xf32> to vector<4x8x8xf32>
    %58 = arith.truncf %57 : vector<4x8x8xf32> to vector<4x8x8xbf16>
    %59 = vector.shape_cast %53 : vector<1x8x32xf32> to vector<1x8x4x8xf32>
    %60 = tpu.transpose %59, [0, 2, 1, 3] : vector<1x8x4x8xf32> -> vector<1x4x8x8xf32>
    %61 = vector.shape_cast %60 : vector<1x4x8x8xf32> to vector<4x8x8xf32>
    %62 = arith.truncf %61 : vector<4x8x8xf32> to vector<4x8x8xbf16>
    %63 = vector.shape_cast %54 : vector<1x8x32xf32> to vector<1x8x4x8xf32>
    %64 = tpu.transpose %63, [0, 2, 1, 3] : vector<1x8x4x8xf32> -> vector<1x4x8x8xf32>
    %65 = vector.shape_cast %64 : vector<1x4x8x8xf32> to vector<4x8x8xf32>
    %66 = arith.truncf %65 : vector<4x8x8xf32> to vector<4x8x8xbf16>
    "tpu.trace_start"() <{level = 10 : i32, message = "bqd,bkd->bqk"}> : () -> ()
    %cst_54 = arith.constant dense<0.000000e+00> : vector<4x8x8xf32>
    %67 = tpu.matmul %58, %62, %cst_54 {dimension_numbers = #tpu.dot_dimension_numbers<[2], [2], [1], [1], [0, 0, 0, 1, 1, 1], [0], [0]>} : vector<4x8x8xbf16>, vector<4x8x8xbf16>, vector<4x8x8xf32> -> vector<4x8x8xf32>
    "tpu.trace_stop"() : () -> ()
    %cst_55 = arith.constant dense<0xFF800000> : vector<4x8xf32>
    %68 = vector.multi_reduction <maximumf>, %67, %cst_55 [2] : vector<4x8x8xf32> to vector<4x8xf32>
    %69 = vector.shape_cast %68 : vector<4x8xf32> to vector<4x8x1xf32>
    %70 = vector.broadcast %69 : vector<4x8x1xf32> to vector<4x8x8xf32>
    %71 = arith.subf %67, %70 : vector<4x8x8xf32>
    %72 = math.exp %71 : vector<4x8x8xf32>
    %cst_56 = arith.constant dense<0.000000e+00> : vector<4x8xf32>
    %73 = vector.multi_reduction <add>, %72, %cst_56 [2] : vector<4x8x8xf32> to vector<4x8xf32>
    %74 = vector.shape_cast %73 : vector<4x8xf32> to vector<4x8x1xf32>
    %75 = tpu.reciprocal %74 {approx = true} : vector<4x8x1xf32> -> vector<4x8x1xf32>
    %76 = vector.broadcast %75 : vector<4x8x1xf32> to vector<4x8x8xf32>
    %77 = arith.mulf %72, %76 : vector<4x8x8xf32>
    %78 = arith.truncf %77 : vector<4x8x8xf32> to vector<4x8x8xbf16>
    "tpu.trace_start"() <{level = 10 : i32, message = "bqk,bkd->bqd"}> : () -> ()
    %cst_57 = arith.constant dense<0.000000e+00> : vector<4x8x8xf32>
    %79 = tpu.matmul %78, %66, %cst_57 {dimension_numbers = #tpu.dot_dimension_numbers<[2], [1], [1], [2], [0, 0, 0, 1, 1, 2], [0], [0]>} : vector<4x8x8xbf16>, vector<4x8x8xbf16>, vector<4x8x8xf32> -> vector<4x8x8xf32>
    "tpu.trace_stop"() : () -> ()
    %80 = vector.shape_cast %79 : vector<4x8x8xf32> to vector<1x4x8x8xf32>
    %81 = tpu.transpose %80, [0, 2, 1, 3] : vector<1x4x8x8xf32> -> vector<1x8x4x8xf32>
    %82 = vector.shape_cast %81 : vector<1x8x4x8xf32> to vector<1x8x32xf32>
    %83 = arith.truncf %82 : vector<1x8x32xf32> to vector<1x8x32xbf16>
    %84 = vector.shape_cast %83 : vector<1x8x32xbf16> to vector<8x32xbf16>
    %cst_58 = arith.constant dense<0.000000e+00> : vector<8x32xf32>
    %85 = tpu.matmul %84, %8, %cst_58 {dimension_numbers = #tpu.dot_dimension_numbers<[1], [0], [0], [1], [0, 0, 1, 1], [], []>} : vector<8x32xbf16>, vector<32x32xbf16>, vector<8x32xf32> -> vector<8x32xf32>
    %86 = vector.shape_cast %85 : vector<8x32xf32> to vector<1x8x32xf32>
    %87 = vector.shape_cast %22 : vector<1x32xf32> to vector<1x1x32xf32>
    %88 = vector.broadcast %87 : vector<1x1x32xf32> to vector<1x8x32xf32>
    %89 = arith.addf %86, %88 : vector<1x8x32xf32>
    %90 = arith.addf %3, %89 : vector<1x8x32xf32>
    %cst_59 = arith.constant dense<0.000000e+00> : vector<1x8xf32>
    %91 = vector.multi_reduction <add>, %90, %cst_59 [2] : vector<1x8x32xf32> to vector<1x8xf32>
    %92 = vector.shape_cast %91 : vector<1x8xf32> to vector<1x8x1xf32>
    %cst_60 = arith.constant 3.200000e+01 : f32
    %93 = vector.broadcast %cst_60 : f32 to vector<1x8x1xf32>
    %94 = arith.divf %92, %93 : vector<1x8x1xf32>
    %95 = vector.broadcast %94 : vector<1x8x1xf32> to vector<1x8x32xf32>
    %96 = arith.subf %90, %95 : vector<1x8x32xf32>
    %97 = arith.mulf %96, %96 : vector<1x8x32xf32>
    %cst_61 = arith.constant dense<0.000000e+00> : vector<1x8xf32>
    %98 = vector.multi_reduction <add>, %97, %cst_61 [2] : vector<1x8x32xf32> to vector<1x8xf32>
    %99 = vector.shape_cast %98 : vector<1x8xf32> to vector<1x8x1xf32>
    %cst_62 = arith.constant 3.200000e+01 : f32
    %100 = vector.broadcast %cst_62 : f32 to vector<1x8x1xf32>
    %101 = arith.divf %99, %100 : vector<1x8x1xf32>
    %102 = vector.broadcast %94 : vector<1x8x1xf32> to vector<1x8x32xf32>
    %103 = arith.subf %90, %102 : vector<1x8x32xf32>
    %cst_63 = arith.constant 9.99999974E-6 : f32
    %104 = vector.broadcast %cst_63 : f32 to vector<1x8x1xf32>
    %105 = arith.addf %101, %104 : vector<1x8x1xf32>
    %106 = math.rsqrt %105 : vector<1x8x1xf32>
    %107 = vector.broadcast %106 : vector<1x8x1xf32> to vector<1x8x32xf32>
    %108 = arith.mulf %103, %107 : vector<1x8x32xf32>
    %109 = vector.shape_cast %34 : vector<1x32xf32> to vector<1x1x32xf32>
    %110 = vector.broadcast %109 : vector<1x1x32xf32> to vector<1x8x32xf32>
    %111 = arith.mulf %108, %110 : vector<1x8x32xf32>
    %112 = vector.shape_cast %36 : vector<1x32xf32> to vector<1x1x32xf32>
    %113 = vector.broadcast %112 : vector<1x1x32xf32> to vector<1x8x32xf32>
    %114 = arith.addf %111, %113 : vector<1x8x32xf32>
    %115 = arith.truncf %114 : vector<1x8x32xf32> to vector<1x8x32xbf16>
    %116 = vector.shape_cast %115 : vector<1x8x32xbf16> to vector<8x32xbf16>
    %cst_64 = arith.constant dense<0.000000e+00> : vector<8x32xf32>
    %117 = tpu.matmul %116, %10, %cst_64 {dimension_numbers = #tpu.dot_dimension_numbers<[1], [0], [0], [1], [0, 0, 1, 1], [], []>} : vector<8x32xbf16>, vector<32x32xbf16>, vector<8x32xf32> -> vector<8x32xf32>
    %118 = vector.shape_cast %117 : vector<8x32xf32> to vector<1x8x32xf32>
    %119 = vector.shape_cast %24 : vector<1x32xf32> to vector<1x1x32xf32>
    %120 = vector.broadcast %119 : vector<1x1x32xf32> to vector<1x8x32xf32>
    %121 = arith.addf %118, %120 : vector<1x8x32xf32>
    %122 = vector.shape_cast %4 : vector<1x16x32xbf16> to vector<16x32xbf16>
    %cst_65 = arith.constant dense<0.000000e+00> : vector<16x64xf32>
    %123 = tpu.matmul %122, %12, %cst_65 {dimension_numbers = #tpu.dot_dimension_numbers<[1], [0], [0], [1], [0, 0, 1, 1], [], []>} : vector<16x32xbf16>, vector<32x64xbf16>, vector<16x64xf32> -> vector<16x64xf32>
    %124 = vector.shape_cast %123 : vector<16x64xf32> to vector<1x16x64xf32>
    %125 = vector.shape_cast %26 : vector<1x64xf32> to vector<1x1x64xf32>
    %126 = vector.broadcast %125 : vector<1x1x64xf32> to vector<1x16x64xf32>
    %127 = arith.addf %124, %126 : vector<1x16x64xf32>
    %128 = vector.extract_strided_slice %127 {offsets = [0, 0, 0], sizes = [1, 16, 32], strides = [1, 1, 1]} : vector<1x16x64xf32> to vector<1x16x32xf32>
    %129 = vector.extract_strided_slice %127 {offsets = [0, 0, 32], sizes = [1, 16, 32], strides = [1, 1, 1]} : vector<1x16x64xf32> to vector<1x16x32xf32>
    %130 = vector.shape_cast %121 : vector<1x8x32xf32> to vector<1x8x4x8xf32>
    %131 = tpu.transpose %130, [0, 2, 1, 3] : vector<1x8x4x8xf32> -> vector<1x4x8x8xf32>
    %132 = vector.shape_cast %131 : vector<1x4x8x8xf32> to vector<4x8x8xf32>
    %133 = arith.truncf %132 : vector<4x8x8xf32> to vector<4x8x8xbf16>
    %134 = vector.shape_cast %128 : vector<1x16x32xf32> to vector<1x16x4x8xf32>
    %135 = tpu.transpose %134, [0, 2, 1, 3] : vector<1x16x4x8xf32> -> vector<1x4x16x8xf32>
    %136 = vector.shape_cast %135 : vector<1x4x16x8xf32> to vector<4x16x8xf32>
    %137 = arith.truncf %136 : vector<4x16x8xf32> to vector<4x16x8xbf16>
    %138 = vector.shape_cast %129 : vector<1x16x32xf32> to vector<1x16x4x8xf32>
    %139 = tpu.transpose %138, [0, 2, 1, 3] : vector<1x16x4x8xf32> -> vector<1x4x16x8xf32>
    %140 = vector.shape_cast %139 : vector<1x4x16x8xf32> to vector<4x16x8xf32>
    %141 = arith.truncf %140 : vector<4x16x8xf32> to vector<4x16x8xbf16>
    "tpu.trace_start"() <{level = 10 : i32, message = "bqd,bkd->bqk"}> : () -> ()
    %cst_66 = arith.constant dense<0.000000e+00> : vector<4x8x16xf32>
    %142 = tpu.matmul %133, %137, %cst_66 {dimension_numbers = #tpu.dot_dimension_numbers<[2], [2], [1], [1], [0, 0, 0, 1, 1, 1], [0], [0]>} : vector<4x8x8xbf16>, vector<4x16x8xbf16>, vector<4x8x16xf32> -> vector<4x8x16xf32>
    "tpu.trace_stop"() : () -> ()
    %cst_67 = arith.constant dense<0xFF800000> : vector<4x8xf32>
    %143 = vector.multi_reduction <maximumf>, %142, %cst_67 [2] : vector<4x8x16xf32> to vector<4x8xf32>
    %144 = vector.shape_cast %143 : vector<4x8xf32> to vector<4x8x1xf32>
    %145 = vector.broadcast %144 : vector<4x8x1xf32> to vector<4x8x16xf32>
    %146 = arith.subf %142, %145 : vector<4x8x16xf32>
    %147 = math.exp %146 : vector<4x8x16xf32>
    %cst_68 = arith.constant dense<0.000000e+00> : vector<4x8xf32>
    %148 = vector.multi_reduction <add>, %147, %cst_68 [2] : vector<4x8x16xf32> to vector<4x8xf32>
    %149 = vector.shape_cast %148 : vector<4x8xf32> to vector<4x8x1xf32>
    %150 = vector.broadcast %149 : vector<4x8x1xf32> to vector<4x8x16xf32>
    %151 = arith.divf %147, %150 : vector<4x8x16xf32>
    %152 = arith.truncf %151 : vector<4x8x16xf32> to vector<4x8x16xbf16>
    "tpu.trace_start"() <{level = 10 : i32, message = "bqk,bkd->bqd"}> : () -> ()
    %cst_69 = arith.constant dense<0.000000e+00> : vector<4x8x8xf32>
    %153 = tpu.matmul %152, %141, %cst_69 {dimension_numbers = #tpu.dot_dimension_numbers<[2], [1], [1], [2], [0, 0, 0, 1, 1, 2], [0], [0]>} : vector<4x8x16xbf16>, vector<4x16x8xbf16>, vector<4x8x8xf32> -> vector<4x8x8xf32>
    "tpu.trace_stop"() : () -> ()
    %154 = vector.shape_cast %153 : vector<4x8x8xf32> to vector<1x4x8x8xf32>
    %155 = tpu.transpose %154, [0, 2, 1, 3] : vector<1x4x8x8xf32> -> vector<1x8x4x8xf32>
    %156 = vector.shape_cast %155 : vector<1x8x4x8xf32> to vector<1x8x32xf32>
    %157 = vector.shape_cast %151 : vector<4x8x16xf32> to vector<1x4x8x16xf32>
    %158 = arith.truncf %156 : vector<1x8x32xf32> to vector<1x8x32xbf16>
    %159 = vector.shape_cast %158 : vector<1x8x32xbf16> to vector<8x32xbf16>
    %cst_70 = arith.constant dense<0.000000e+00> : vector<8x32xf32>
    %160 = tpu.matmul %159, %14, %cst_70 {dimension_numbers = #tpu.dot_dimension_numbers<[1], [0], [0], [1], [0, 0, 1, 1], [], []>} : vector<8x32xbf16>, vector<32x32xbf16>, vector<8x32xf32> -> vector<8x32xf32>
    %161 = vector.shape_cast %160 : vector<8x32xf32> to vector<1x8x32xf32>
    %162 = vector.shape_cast %28 : vector<1x32xf32> to vector<1x1x32xf32>
    %163 = vector.broadcast %162 : vector<1x1x32xf32> to vector<1x8x32xf32>
    %164 = arith.addf %161, %163 : vector<1x8x32xf32>
    %165 = arith.addf %114, %164 : vector<1x8x32xf32>
    %cst_71 = arith.constant dense<0.000000e+00> : vector<1x8xf32>
    %166 = vector.multi_reduction <add>, %165, %cst_71 [2] : vector<1x8x32xf32> to vector<1x8xf32>
    %167 = vector.shape_cast %166 : vector<1x8xf32> to vector<1x8x1xf32>
    %cst_72 = arith.constant 3.200000e+01 : f32
    %168 = vector.broadcast %cst_72 : f32 to vector<1x8x1xf32>
    %169 = arith.divf %167, %168 : vector<1x8x1xf32>
    %170 = vector.broadcast %169 : vector<1x8x1xf32> to vector<1x8x32xf32>
    %171 = arith.subf %165, %170 : vector<1x8x32xf32>
    %172 = arith.mulf %171, %171 : vector<1x8x32xf32>
    %cst_73 = arith.constant dense<0.000000e+00> : vector<1x8xf32>
    %173 = vector.multi_reduction <add>, %172, %cst_73 [2] : vector<1x8x32xf32> to vector<1x8xf32>
    %174 = vector.shape_cast %173 : vector<1x8xf32> to vector<1x8x1xf32>
    %cst_74 = arith.constant 3.200000e+01 : f32
    %175 = vector.broadcast %cst_74 : f32 to vector<1x8x1xf32>
    %176 = arith.divf %174, %175 : vector<1x8x1xf32>
    %177 = vector.broadcast %169 : vector<1x8x1xf32> to vector<1x8x32xf32>
    %178 = arith.subf %165, %177 : vector<1x8x32xf32>
    %cst_75 = arith.constant 9.99999974E-6 : f32
    %179 = vector.broadcast %cst_75 : f32 to vector<1x8x1xf32>
    %180 = arith.addf %176, %179 : vector<1x8x1xf32>
    %181 = math.rsqrt %180 : vector<1x8x1xf32>
    %182 = vector.broadcast %181 : vector<1x8x1xf32> to vector<1x8x32xf32>
    %183 = arith.mulf %178, %182 : vector<1x8x32xf32>
    %184 = vector.shape_cast %38 : vector<1x32xf32> to vector<1x1x32xf32>
    %185 = vector.broadcast %184 : vector<1x1x32xf32> to vector<1x8x32xf32>
    %186 = arith.mulf %183, %185 : vector<1x8x32xf32>
    %187 = vector.shape_cast %40 : vector<1x32xf32> to vector<1x1x32xf32>
    %188 = vector.broadcast %187 : vector<1x1x32xf32> to vector<1x8x32xf32>
    %189 = arith.addf %186, %188 : vector<1x8x32xf32>
    %190 = arith.truncf %189 : vector<1x8x32xf32> to vector<1x8x32xbf16>
    %191 = vector.shape_cast %190 : vector<1x8x32xbf16> to vector<8x32xbf16>
    %cst_76 = arith.constant dense<0.000000e+00> : vector<8x64xf32>
    %192 = tpu.matmul %191, %16, %cst_76 {dimension_numbers = #tpu.dot_dimension_numbers<[1], [0], [0], [1], [0, 0, 1, 1], [], []>} : vector<8x32xbf16>, vector<32x64xbf16>, vector<8x64xf32> -> vector<8x64xf32>
    %193 = vector.shape_cast %192 : vector<8x64xf32> to vector<1x8x64xf32>
    %194 = vector.shape_cast %30 : vector<1x64xf32> to vector<1x1x64xf32>
    %195 = vector.broadcast %194 : vector<1x1x64xf32> to vector<1x8x64xf32>
    %196 = arith.addf %193, %195 : vector<1x8x64xf32>
    %cst_77 = arith.constant 0.000000e+00 : f32
    %197 = vector.broadcast %cst_77 : f32 to vector<1x8x64xf32>
    %198 = arith.maximumf %196, %197 : vector<1x8x64xf32>
    %199 = arith.truncf %198 : vector<1x8x64xf32> to vector<1x8x64xbf16>
    %200 = vector.shape_cast %199 : vector<1x8x64xbf16> to vector<8x64xbf16>
    %cst_78 = arith.constant dense<0.000000e+00> : vector<8x32xf32>
    %201 = tpu.matmul %200, %18, %cst_78 {dimension_numbers = #tpu.dot_dimension_numbers<[1], [0], [0], [1], [0, 0, 1, 1], [], []>} : vector<8x64xbf16>, vector<64x32xbf16>, vector<8x32xf32> -> vector<8x32xf32>
    %202 = vector.shape_cast %201 : vector<8x32xf32> to vector<1x8x32xf32>
    %203 = vector.shape_cast %32 : vector<1x32xf32> to vector<1x1x32xf32>
    %204 = vector.broadcast %203 : vector<1x1x32xf32> to vector<1x8x32xf32>
    %205 = arith.addf %202, %204 : vector<1x8x32xf32>
    %206 = arith.addf %189, %205 : vector<1x8x32xf32>
    %cst_79 = arith.constant dense<0.000000e+00> : vector<1x8xf32>
    %207 = vector.multi_reduction <add>, %206, %cst_79 [2] : vector<1x8x32xf32> to vector<1x8xf32>
    %208 = vector.shape_cast %207 : vector<1x8xf32> to vector<1x8x1xf32>
    %cst_80 = arith.constant 3.200000e+01 : f32
    %209 = vector.broadcast %cst_80 : f32 to vector<1x8x1xf32>
    %210 = arith.divf %208, %209 : vector<1x8x1xf32>
    %211 = vector.broadcast %210 : vector<1x8x1xf32> to vector<1x8x32xf32>
    %212 = arith.subf %206, %211 : vector<1x8x32xf32>
    %213 = arith.mulf %212, %212 : vector<1x8x32xf32>
    %cst_81 = arith.constant dense<0.000000e+00> : vector<1x8xf32>
    %214 = vector.multi_reduction <add>, %213, %cst_81 [2] : vector<1x8x32xf32> to vector<1x8xf32>
    %215 = vector.shape_cast %214 : vector<1x8xf32> to vector<1x8x1xf32>
    %cst_82 = arith.constant 3.200000e+01 : f32
    %216 = vector.broadcast %cst_82 : f32 to vector<1x8x1xf32>
    %217 = arith.divf %215, %216 : vector<1x8x1xf32>
    %218 = vector.broadcast %210 : vector<1x8x1xf32> to vector<1x8x32xf32>
    %219 = arith.subf %206, %218 : vector<1x8x32xf32>
    %cst_83 = arith.constant 9.99999974E-6 : f32
    %220 = vector.broadcast %cst_83 : f32 to vector<1x8x1xf32>
    %221 = arith.addf %217, %220 : vector<1x8x1xf32>
    %222 = math.rsqrt %221 : vector<1x8x1xf32>
    %223 = vector.broadcast %222 : vector<1x8x1xf32> to vector<1x8x32xf32>
    %224 = arith.mulf %219, %223 : vector<1x8x32xf32>
    %225 = vector.shape_cast %42 : vector<1x32xf32> to vector<1x1x32xf32>
    %226 = vector.broadcast %225 : vector<1x1x32xf32> to vector<1x8x32xf32>
    %227 = arith.mulf %224, %226 : vector<1x8x32xf32>
    %228 = vector.shape_cast %44 : vector<1x32xf32> to vector<1x1x32xf32>
    %229 = vector.broadcast %228 : vector<1x1x32xf32> to vector<1x8x32xf32>
    %230 = arith.addf %227, %229 : vector<1x8x32xf32>
    %c1_i32 = arith.constant 1 : i32
    %231 = arith.cmpi slt, %arg1, %c1_i32 : i32
    %232 = arith.extui %231 : i1 to i32
    %c0_i32_84 = arith.constant 0 : i32
    %233 = arith.cmpi ne, %232, %c0_i32_84 : i32
    scf.if %233 {
      %c0_87 = arith.constant 0 : index
      %c0_88 = arith.constant 0 : index
      %c0_89 = arith.constant 0 : index
      %237 = vector.load %arg9[%c0_87, %c0_88, %c0_89] : memref<1x8x32xf32, #tpu.memory_space<vmem>>, vector<1x8x32xf32>
      tpu.vector_store %arg9[%c0_87, %c0_88, %c0_89], %230 {strides = array<i32>} : memref<1x8x32xf32, #tpu.memory_space<vmem>>, vector<1x8x32xf32>,
    } else {
    }
    %c1_i32_85 = arith.constant 1 : i32
    %234 = arith.cmpi eq, %arg1, %c1_i32_85 : i32
    %235 = arith.extui %234 : i1 to i32
    %c0_i32_86 = arith.constant 0 : i32
    %236 = arith.cmpi ne, %235, %c0_i32_86 : i32
    scf.if %236 {
      %c0_87 = arith.constant 0 : index
      %c0_88 = arith.constant 0 : index
      %237 = vector.load %arg7[%c0_87, %c0_88] : memref<1x32xf32, #tpu.memory_space<vmem>>, vector<1x32xf32>
      %c0_89 = arith.constant 0 : index
      %c0_90 = arith.constant 0 : index
      %238 = vector.load %arg8[%c0_89, %c0_90] : memref<1x32xf32, #tpu.memory_space<vmem>>, vector<1x32xf32>
      %cst_91 = arith.constant dense<0.000000e+00> : vector<1x8xf32>
      %239 = vector.multi_reduction <add>, %230, %cst_91 [2] : vector<1x8x32xf32> to vector<1x8xf32>
      %240 = vector.shape_cast %239 : vector<1x8xf32> to vector<1x8x1xf32>
      %cst_92 = arith.constant 3.200000e+01 : f32
      %241 = vector.broadcast %cst_92 : f32 to vector<1x8x1xf32>
      %242 = arith.divf %240, %241 : vector<1x8x1xf32>
      %243 = vector.broadcast %242 : vector<1x8x1xf32> to vector<1x8x32xf32>
      %244 = arith.subf %230, %243 : vector<1x8x32xf32>
      %245 = arith.mulf %244, %244 : vector<1x8x32xf32>
      %cst_93 = arith.constant dense<0.000000e+00> : vector<1x8xf32>
      %246 = vector.multi_reduction <add>, %245, %cst_93 [2] : vector<1x8x32xf32> to vector<1x8xf32>
      %247 = vector.shape_cast %246 : vector<1x8xf32> to vector<1x8x1xf32>
      %cst_94 = arith.constant 3.200000e+01 : f32
      %248 = vector.broadcast %cst_94 : f32 to vector<1x8x1xf32>
      %249 = arith.divf %247, %248 : vector<1x8x1xf32>
      %250 = vector.broadcast %242 : vector<1x8x1xf32> to vector<1x8x32xf32>
      %251 = arith.subf %230, %250 : vector<1x8x32xf32>
      %cst_95 = arith.constant 9.99999974E-6 : f32
      %252 = vector.broadcast %cst_95 : f32 to vector<1x8x1xf32>
      %253 = arith.addf %249, %252 : vector<1x8x1xf32>
      %254 = math.rsqrt %253 : vector<1x8x1xf32>
      %255 = vector.broadcast %254 : vector<1x8x1xf32> to vector<1x8x32xf32>
      %256 = arith.mulf %251, %255 : vector<1x8x32xf32>
      %257 = vector.shape_cast %237 : vector<1x32xf32> to vector<1x1x32xf32>
      %258 = vector.broadcast %257 : vector<1x1x32xf32> to vector<1x8x32xf32>
      %259 = arith.mulf %256, %258 : vector<1x8x32xf32>
      %260 = vector.shape_cast %238 : vector<1x32xf32> to vector<1x1x32xf32>
      %261 = vector.broadcast %260 : vector<1x1x32xf32> to vector<1x8x32xf32>
      %262 = arith.addf %259, %261 : vector<1x8x32xf32>
      %c0_96 = arith.constant 0 : index
      %c0_97 = arith.constant 0 : index
      %c0_98 = arith.constant 0 : index
      %263 = vector.load %arg9[%c0_96, %c0_97, %c0_98] : memref<1x8x32xf32, #tpu.memory_space<vmem>>, vector<1x8x32xf32>
      tpu.vector_store %arg9[%c0_96, %c0_97, %c0_98], %262 {strides = array<i32>} : memref<1x8x32xf32, #tpu.memory_space<vmem>>, vector<1x8x32xf32>,
      %cst_99 = arith.constant dense<0.000000e+00> : vector<1x8x16xf32>
      %264 = vector.multi_reduction <add>, %157, %cst_99 [1] : vector<1x4x8x16xf32> to vector<1x8x16xf32>
      %cst_100 = arith.constant 2.500000e-01 : f32
      %265 = vector.broadcast %cst_100 : f32 to vector<1x8x16xf32>
      %266 = arith.mulf %264, %265 : vector<1x8x16xf32>
      %c0_101 = arith.constant 0 : index
      %c0_102 = arith.constant 0 : index
      %c0_103 = arith.constant 0 : index
      %267 = vector.load %arg10[%c0_101, %c0_102, %c0_103] : memref<1x8x16xf32, #tpu.memory_space<vmem>>, vector<1x8x16xf32>
      tpu.vector_store %arg10[%c0_101, %c0_102, %c0_103], %266 {strides = array<i32>} : memref<1x8x16xf32, #tpu.memory_space<vmem>>, vector<1x8x16xf32>,
    } else {
    }
    return
  }
  func.func @transform_0(%arg0: i32, %arg1: i32) -> (i32, i32, i32) {
    %c0_i32 = arith.constant 0 : i32
    %c0_i32_0 = arith.constant 0 : i32
    %c0_i32_1 = arith.constant 0 : i32
    return %arg0, %c0_i32, %c0_i32_0 : i32, i32, i32
  }
  func.func @transform_1(%arg0: i32, %arg1: i32) -> (i32, i32, i32) {
    %c0_i32 = arith.constant 0 : i32
    %c0_i32_0 = arith.constant 0 : i32
    %c0_i32_1 = arith.constant 0 : i32
    return %arg0, %c0_i32, %c0_i32_0 : i32, i32, i32
  }
  func.func @transform_2(%arg0: i32, %arg1: i32) -> (i32, i32, i32) {
    %c0_i32 = arith.constant 0 : i32
    %c0_i32_0 = arith.constant 0 : i32
    %c0_i32_1 = arith.constant 0 : i32
    return %arg1, %c0_i32, %c0_i32_0 : i32, i32, i32
  }
  func.func @transform_3(%arg0: i32, %arg1: i32) -> (i32, i32, i32) {
    %c0_i32 = arith.constant 0 : i32
    %c0_i32_0 = arith.constant 0 : i32
    %c0_i32_1 = arith.constant 0 : i32
    return %arg1, %c0_i32, %c0_i32_0 : i32, i32, i32
  }
  func.func @transform_4(%arg0: i32, %arg1: i32) -> (i32, i32, i32) {
    %c0_i32 = arith.constant 0 : i32
    %c0_i32_0 = arith.constant 0 : i32
    %c0_i32_1 = arith.constant 0 : i32
    return %arg1, %c0_i32, %c0_i32_0 : i32, i32, i32
  }
  func.func @transform_5(%arg0: i32, %arg1: i32) -> (i32, i32) {
    %c0_i32 = arith.constant 0 : i32
    %c0_i32_0 = arith.constant 0 : i32
    %c0_i32_1 = arith.constant 0 : i32
    return %c0_i32, %c0_i32_0 : i32, i32
  }
  func.func @transform_6(%arg0: i32, %arg1: i32) -> (i32, i32) {
    %c0_i32 = arith.constant 0 : i32
    %c0_i32_0 = arith.constant 0 : i32
    %c0_i32_1 = arith.constant 0 : i32
    return %c0_i32, %c0_i32_0 : i32, i32
  }
  func.func @transform_7(%arg0: i32, %arg1: i32) -> (i32, i32, i32) {
    %c0_i32 = arith.constant 0 : i32
    %c0_i32_0 = arith.constant 0 : i32
    %c0_i32_1 = arith.constant 0 : i32
    return %arg0, %c0_i32, %c0_i32_0 : i32, i32, i32
  }
  func.func @transform_8(%arg0: i32, %arg1: i32) -> (i32, i32, i32) {
    %c0_i32 = arith.constant 0 : i32
    %c0_i32_0 = arith.constant 0 : i32
    %c0_i32_1 = arith.constant 0 : i32
    return %arg0, %c0_i32, %c0_i32_0 : i32, i32, i32
  }
}

</mosaic_0001>

<llo_original>
// kernel: tpu_custom_call.1
$region0: #{tpu_custom_call.1}
  #allocation0 [shape = 'u32[]', space=smem, size = 0x4, offset = 0x4, fixed_abs, tag = 'smem constant byte address 0x4 - core index']
  #allocation1 [shape = 'u32[72,128]{1,0:T(1,128)}', space=vmem, size = 0x9000, scoped, tag = 'internal scratch']
  %s0 = inlined_call_operand.hbm [shape: f32[2,8,32], index: 0, kind: input, shape index: {}]
  %s1 = inlined_call_operand.hbm [shape: bf16[2,16,32], index: 1, kind: input, shape index: {}]
  %s2 = inlined_call_operand.vmem [shape: bf16[2,32,320], index: 2, kind: input, shape index: {}]
  %s3 = inlined_call_operand.vmem [shape: bf16[2,64,32], index: 3, kind: input, shape index: {}]
  %s4 = inlined_call_operand.hbm [shape: f32[2,1,544], index: 4, kind: input, shape index: {}]
  %s5 = inlined_call_operand.vmem [shape: f32[1,32], index: 5, kind: input, shape index: {}]
  %s6 = inlined_call_operand.vmem [shape: f32[1,32], index: 6, kind: input, shape index: {}]
  %s7 = inlined_call_operand.hbm [shape: f32[2,8,32], index: 7, kind: output, shape index: {0}]
  %s8 = inlined_call_operand.hbm [shape: f32[2,8,16], index: 8, kind: output, shape index: {1}]
  %9 = xla_tuple %s7, %s8
  %s10 = sld [smem:[#allocation0]]
  $region93: #{tpu_custom_call.1} parent=0
    _
  %s12 = ssub.s32 1, %s10
  %s13 = scalar_select 0, %s12, %s10
  $region1: #{tpu_custom_call.1} parent=0
    #allocation2 [shape = 'u8[8192]{0}', space=vmem, size = 0x2000, scoped, tag = 'input window, operand 0']
    #allocation3 [shape = 's32[2]{0}', space=sflag, size = 0x8, scoped, tag = 'scoped memory for tpu_custom_call.1']
    #allocation4 [shape = 's32[2]{0}', space=sflag, size = 0x8, scoped, tag = 'scoped memory for tpu_custom_call.1']
    #allocation5 [shape = 'u8[8192]{0}', space=vmem, size = 0x2000, scoped, tag = 'input window, operand 1']
    #allocation6 [shape = 's32[2]{0}', space=sflag, size = 0x8, scoped, tag = 'scoped memory for tpu_custom_call.1']
    #allocation7 [shape = 'u8[5120]{0}', space=vmem, size = 0x1400, scoped, tag = 'input window, operand 4']
    #allocation8 [shape = 'u8[8192]{0}', space=vmem, size = 0x2000, scoped, tag = 'output window, operand 0']
    #allocation9 [shape = 'u8[8192]{0}', space=vmem, size = 0x2000, scoped, tag = 'output window, operand 1']
    #allocation10 [shape = 's32[2]{0}', space=sflag, size = 0x8, scoped, tag = 'scoped memory for tpu_custom_call.1']
    %14 = vsyncpa [#allocation3], 0
    %s15 = scalar_lea.sflag [#allocation3], 1
    %16 = vsyncpa %s15, 0
    %17 = vsyncpa [#allocation6], 0
    %s18 = scalar_lea.sflag [#allocation6], 1
    %19 = vsyncpa %s18, 0
    %20 = vsyncpa [#allocation4], 0
    %s21 = scalar_lea.sflag [#allocation4], 1
    %22 = vsyncpa %s21, 0
    %23 = vsyncpa [#allocation10], 0
    %s24 = scalar_lea.sflag [#allocation10], 1
    %25 = vsyncpa %s24, 0
    loop: start=0, step=1, limit=6
    $region2: #{tpu_custom_call.1} parent=1 // loop_pre_header
      _
    $region3: #{tpu_custom_call.1} parent=1 // loop_header
      %s27 = sphi 0, %s31
      %p28 = scmp.ge.s32.totalorder %s27, 6
      %s34 = sphi 0, %s46
      %s35 = sphi 0, %s42
      %s36 = sphi 0, %s34
      %s37 = sphi 0, %s35
      %s38 = sphi 0, %s36
      %s39 = sphi 0, %s37
      %s49 = sphi 0, %s51
      %s52 = sphi 0, %s49
      %s53 = sphi 0, %s52
      %s69 = sphi 0, %s53
      %s75 = sphi 0, %s77
      %s78 = sphi 0, %s75
      %s79 = sphi 0, %s78
      %s95 = sphi 0, %s79
      %s101 = sphi 0, %s103
      %s104 = sphi 0, %s101
      %s105 = sphi 0, %s104
      %s121 = sphi 0, %s105
      %s127 = sphi 0, %s129
      %s130 = sphi 0, %s127
      %s131 = sphi 0, %s130
      %s147 = sphi 0, %s131
      %s153 = sphi 0, %s155
      %s156 = sphi 0, %s153
      %s157 = sphi 0, %s156
      %s173 = sphi 0, %s157
      %s177 = sphi 0, %s177
      %s179 = sphi 0, %s177
      %s180 = sphi 0, %s179
      %s194 = sphi 0, %s180
      %s198 = sphi 0, %s198
      %s200 = sphi 0, %s198
      %s201 = sphi 0, %s200
      %s215 = sphi 0, %s201
      %s221 = sphi 0, %s223
      %s224 = sphi 0, %s221
      %s225 = sphi 0, %s224
      %s241 = sphi 0, %s225
      %s247 = sphi 0, %s249
      %s250 = sphi 0, %s247
      %s251 = sphi 0, %s250
      %s267 = sphi 0, %s251
    $region4: #{tpu_custom_call.1} parent=1 // loop_header_branch
      %30 = sbr.rel (%p28) target = $region8
    $region5: #{tpu_custom_call.1} parent=1 // loop_body
      %s32 = ssub.s32 %s27, 1
      %s33 = ssub.s32 %s27, 2
      %s40 = sadd.s32 1, %s35
      %p41 = scmp.ge.s32.totalorder %s40, 2
      %s42 = scalar_select %p41, 0, %s40
      %s43 = sadd.s32 1, %s34
      %s44 = scalar_select %p41, %s43, %s34
      %p45 = scmp.ge.s32.totalorder %s44, 2
      %s46 = scalar_select %p45, 0, %s44
      %s47 = ssub.s32 %s34, %s46
      %p48 = scmp.eq.s32.totalorder %s47, 0
      %s50 = sadd.s32 %s49, 1
      %s51 = scalar_select %p48, %s49, %s50
      %p54 = pneg %p48
      %p55 = scmp.eq.s32.totalorder %s27, 3
      %p56 = por %p54, %p55
      %p57 = scmp.ne.s32.totalorder %s49, %s52
      %p58 = scmp.eq.s32.totalorder %s27, 0
      %p59 = por %p57, %p58
      %p60 = scmp.ne.s32.totalorder %s49, %s52
      %p61 = scmp.eq.s32.totalorder %s32, 3
      %p62 = por %p60, %p61
      %p63 = scmp.ne.s32.totalorder %s52, %s53
      %p64 = scmp.eq.s32.totalorder %s32, 0
      %p65 = por %p63, %p64
      %p66 = scmp.ne.s32.totalorder %s52, %s53
      %p67 = scmp.eq.s32.totalorder %s33, 3
      %p68 = por %p66, %p67
      %p70 = scmp.ne.s32.totalorder %s53, %s69
      %p71 = scmp.eq.s32.totalorder %s33, 0
      %p72 = por %p70, %p71
      %s73 = ssub.s32 %s34, %s46
      %p74 = scmp.eq.s32.totalorder %s73, 0
      %s76 = sadd.s32 %s75, 1
      %s77 = scalar_select %p74, %s75, %s76
      %p80 = pneg %p74
      %p81 = scmp.eq.s32.totalorder %s27, 3
      %p82 = por %p80, %p81
      %p83 = scmp.ne.s32.totalorder %s75, %s78
      %p84 = scmp.eq.s32.totalorder %s27, 0
      %p85 = por %p83, %p84
      %p86 = scmp.ne.s32.totalorder %s75, %s78
      %p87 = scmp.eq.s32.totalorder %s32, 3
      %p88 = por %p86, %p87
      %p89 = scmp.ne.s32.totalorder %s78, %s79
      %p90 = scmp.eq.s32.totalorder %s32, 0
      %p91 = por %p89, %p90
      %p92 = scmp.ne.s32.totalorder %s78, %s79
      %p93 = scmp.eq.s32.totalorder %s33, 3
      %p94 = por %p92, %p93
      %p96 = scmp.ne.s32.totalorder %s79, %s95
      %p97 = scmp.eq.s32.totalorder %s33, 0
      %p98 = por %p96, %p97
      %s99 = ssub.s32 %s35, %s42
      %p100 = scmp.eq.s32.totalorder %s99, 0
      %s102 = sadd.s32 %s101, 1
      %s103 = scalar_select %p100, %s101, %s102
      %p106 = pneg %p100
      %p107 = scmp.eq.s32.totalorder %s27, 3
      %p108 = por %p106, %p107
      %p109 = scmp.ne.s32.totalorder %s101, %s104
      %p110 = scmp.eq.s32.totalorder %s27, 0
      %p111 = por %p109, %p110
      %p112 = scmp.ne.s32.totalorder %s101, %s104
      %p113 = scmp.eq.s32.totalorder %s32, 3
      %p114 = por %p112, %p113
      %p115 = scmp.ne.s32.totalorder %s104, %s105
      %p116 = scmp.eq.s32.totalorder %s32, 0
      %p117 = por %p115, %p116
      %p118 = scmp.ne.s32.totalorder %s104, %s105
      %p119 = scmp.eq.s32.totalorder %s33, 3
      %p120 = por %p118, %p119
      %p122 = scmp.ne.s32.totalorder %s105, %s121
      %p123 = scmp.eq.s32.totalorder %s33, 0
      %p124 = por %p122, %p123
      %s125 = ssub.s32 %s35, %s42
      %p126 = scmp.eq.s32.totalorder %s125, 0
      %s128 = sadd.s32 %s127, 1
      %s129 = scalar_select %p126, %s127, %s128
      %p132 = pneg %p126
      %p133 = scmp.eq.s32.totalorder %s27, 3
      %p134 = por %p132, %p133
      %p135 = scmp.ne.s32.totalorder %s127, %s130
      %p136 = scmp.eq.s32.totalorder %s27, 0
      %p137 = por %p135, %p136
      %p138 = scmp.ne.s32.totalorder %s127, %s130
      %p139 = scmp.eq.s32.totalorder %s32, 3
      %p140 = por %p138, %p139
      %p141 = scmp.ne.s32.totalorder %s130, %s131
      %p142 = scmp.eq.s32.totalorder %s32, 0
      %p143 = por %p141, %p142
      %p144 = scmp.ne.s32.totalorder %s130, %s131
      %p145 = scmp.eq.s32.totalorder %s33, 3
      %p146 = por %p144, %p145
      %p148 = scmp.ne.s32.totalorder %s131, %s147
      %p149 = scmp.eq.s32.totalorder %s33, 0
      %p150 = por %p148, %p149
      %s151 = ssub.s32 %s35, %s42
      %p152 = scmp.eq.s32.totalorder %s151, 0
      %s154 = sadd.s32 %s153, 1
      %s155 = scalar_select %p152, %s153, %s154
      %p158 = pneg %p152
      %p159 = scmp.eq.s32.totalorder %s27, 3
      %p160 = por %p158, %p159
      %p161 = scmp.ne.s32.totalorder %s153, %s156
      %p162 = scmp.eq.s32.totalorder %s27, 0
      %p163 = por %p161, %p162
      %p164 = scmp.ne.s32.totalorder %s153, %s156
      %p165 = scmp.eq.s32.totalorder %s32, 3
      %p166 = por %p164, %p165
      %p167 = scmp.ne.s32.totalorder %s156, %s157
      %p168 = scmp.eq.s32.totalorder %s32, 0
      %p169 = por %p167, %p168
      %p170 = scmp.ne.s32.totalorder %s156, %s157
      %p171 = scmp.eq.s32.totalorder %s33, 3
      %p172 = por %p170, %p171
      %p174 = scmp.ne.s32.totalorder %s157, %s173
      %p175 = scmp.eq.s32.totalorder %s33, 0
      %p176 = por %p174, %p175
      %s178 = sadd.s32 %s177, 1
      %p181 = scmp.eq.s32.totalorder %s27, 3
      %p182 = scmp.ne.s32.totalorder %s177, %s179
      %p183 = scmp.eq.s32.totalorder %s27, 0
      %p184 = por %p182, %p183
      %p185 = scmp.ne.s32.totalorder %s177, %s179
      %p186 = scmp.eq.s32.totalorder %s32, 3
      %p187 = por %p185, %p186
      %p188 = scmp.ne.s32.totalorder %s179, %s180
      %p189 = scmp.eq.s32.totalorder %s32, 0
      %p190 = por %p188, %p189
      %p191 = scmp.ne.s32.totalorder %s179, %s180
      %p192 = scmp.eq.s32.totalorder %s33, 3
      %p193 = por %p191, %p192
      %p195 = scmp.ne.s32.totalorder %s180, %s194
      %p196 = scmp.eq.s32.totalorder %s33, 0
      %p197 = por %p195, %p196
      %s199 = sadd.s32 %s198, 1
      %p202 = scmp.eq.s32.totalorder %s27, 3
      %p203 = scmp.ne.s32.totalorder %s198, %s200
      %p204 = scmp.eq.s32.totalorder %s27, 0
      %p205 = por %p203, %p204
      %p206 = scmp.ne.s32.totalorder %s198, %s200
      %p207 = scmp.eq.s32.totalorder %s32, 3
      %p208 = por %p206, %p207
      %p209 = scmp.ne.s32.totalorder %s200, %s201
      %p210 = scmp.eq.s32.totalorder %s32, 0
      %p211 = por %p209, %p210
      %p212 = scmp.ne.s32.totalorder %s200, %s201
      %p213 = scmp.eq.s32.totalorder %s33, 3
      %p214 = por %p212, %p213
      %p216 = scmp.ne.s32.totalorder %s201, %s215
      %p217 = scmp.eq.s32.totalorder %s33, 0
      %p218 = por %p216, %p217
      %s219 = ssub.s32 %s34, %s46
      %p220 = scmp.eq.s32.totalorder %s219, 0
      %s222 = sadd.s32 %s221, 1
      %s223 = scalar_select %p220, %s221, %s222
      %p226 = pneg %p220
      %p227 = scmp.eq.s32.totalorder %s27, 3
      %p228 = por %p226, %p227
      %p229 = scmp.ne.s32.totalorder %s221, %s224
      %p230 = scmp.eq.s32.totalorder %s27, 0
      %p231 = por %p229, %p230
      %p232 = scmp.ne.s32.totalorder %s221, %s224
      %p233 = scmp.eq.s32.totalorder %s32, 3
      %p234 = por %p232, %p233
      %p235 = scmp.ne.s32.totalorder %s224, %s225
      %p236 = scmp.eq.s32.totalorder %s32, 0
      %p237 = por %p235, %p236
      %p238 = scmp.ne.s32.totalorder %s224, %s225
      %p239 = scmp.eq.s32.totalorder %s33, 3
      %p240 = por %p238, %p239
      %p242 = scmp.ne.s32.totalorder %s225, %s241
      %p243 = scmp.eq.s32.totalorder %s33, 0
      %p244 = por %p242, %p243
      %s245 = ssub.s32 %s34, %s46
      %p246 = scmp.eq.s32.totalorder %s245, 0
      %s248 = sadd.s32 %s247, 1
      %s249 = scalar_select %p246, %s247, %s248
      %p252 = pneg %p246
      %p253 = scmp.eq.s32.totalorder %s27, 3
      %p254 = por %p252, %p253
      %p255 = scmp.ne.s32.totalorder %s247, %s250
      %p256 = scmp.eq.s32.totalorder %s27, 0
      %p257 = por %p255, %p256
      %p258 = scmp.ne.s32.totalorder %s247, %s250
      %p259 = scmp.eq.s32.totalorder %s32, 3
      %p260 = por %p258, %p259
      %p261 = scmp.ne.s32.totalorder %s250, %s251
      %p262 = scmp.eq.s32.totalorder %s32, 0
      %p263 = por %p261, %p262
      %p264 = scmp.ne.s32.totalorder %s250, %s251
      %p265 = scmp.eq.s32.totalorder %s33, 3
      %p266 = por %p264, %p265
      %p268 = scmp.ne.s32.totalorder %s251, %s267
      %p269 = scmp.eq.s32.totalorder %s33, 0
      %p270 = por %p268, %p269
      %p271 = scmp.le.s32.totalorder 1, %s27
      %p272 = scmp.lt.s32.totalorder %s27, 5
      %p273 = pnand %p271, %p272
      %p274 = pneg %p273
      // Predicated region
      $region9: #{tpu_custom_call.1} parent=5 // pred_check
        _
      $region10: #{tpu_custom_call.1} parent=5 // pred_check_branch
        %276 = sbr.rel (%p273) target = $region12
      $region11: #{tpu_custom_call.1} parent=5 // pred_region
        %s277 = ssub.s32 %s27, 1
        // Predicated region
        $region13: #{tpu_custom_call.1} parent=11 // pred_check
          %p278 = pneg %p190
        $region14: #{tpu_custom_call.1} parent=11 // pred_check_branch
          %280 = sbr.rel (%p278) target = $region16
        $region15: #{tpu_custom_call.1} parent=11 // pred_region
          _
        $region16: #{tpu_custom_call.1} parent=11 // pred_fallthru
          _
        // Predicated region
        $region17: #{tpu_custom_call.1} parent=11 // pred_check
          %p281 = pneg %p211
        $region18: #{tpu_custom_call.1} parent=11 // pred_check_branch
          %283 = sbr.rel (%p281) target = $region20
        $region19: #{tpu_custom_call.1} parent=11 // pred_region
          _
        $region20: #{tpu_custom_call.1} parent=11 // pred_fallthru
          _
      $region12: #{tpu_custom_call.1} parent=5 // pred_fallthru
        _
      %p284 = scmp.lt.s32.totalorder %s27, 4
      // Predicated region
      $region21: #{tpu_custom_call.1} parent=5 // pred_check
        %p285 = pneg %p284
      $region22: #{tpu_custom_call.1} parent=5 // pred_check_branch
        %287 = sbr.rel (%p285) target = $region24
      $region23: #{tpu_custom_call.1} parent=5 // pred_region
        // Predicated region
        $region25: #{tpu_custom_call.1} parent=23 // pred_check
          %p288 = pneg %p59
        $region26: #{tpu_custom_call.1} parent=23 // pred_check_branch
          %290 = sbr.rel (%p288) target = $region28
        $region27: #{tpu_custom_call.1} parent=23 // pred_region
          %s291 = sand.u32 %s49, 1
          %s292 = scalar_lea.sflag [#allocation3], %s291
          %s293 = sand.u32 %s49, 1
          %s294 = smul.addr %s293, 8
          %s295 = scalar_lea.vmem [#allocation2], %s294
          %297 = vsyncadd %s292, 0
          %s298 = smul.addr %s34, 8
          %s299 = scalar_lea.hbm %s0, %s298
          %s301 = sshll.u32 %s299, 4
          %s302 = int_to_ptr.hbm [resolvable:$true] %s301
          %s303 = sshll.u32 %s295, 4
          %s304 = int_to_ptr.vmem [resolvable:$true] %s303
          %306 = dma.hbm_to_vmem [thread:$0]  %s302, 128, %s304, %s292
        $region28: #{tpu_custom_call.1} parent=23 // pred_fallthru
          _
        // Predicated region
        $region29: #{tpu_custom_call.1} parent=23 // pred_check
          %p307 = pneg %p85
        $region30: #{tpu_custom_call.1} parent=23 // pred_check_branch
          %309 = sbr.rel (%p307) target = $region32
        $region31: #{tpu_custom_call.1} parent=23 // pred_region
          %s310 = sand.u32 %s27, 1
          %s311 = scalar_lea.sflag [#allocation6], %s310
          %s312 = sand.u32 %s75, 1
          %s313 = smul.addr %s312, 8
          %s314 = scalar_lea.vmem [#allocation5], %s313
          %316 = vsyncadd %s311, 0
          %s317 = smul.addr %s34, 2
          %s318 = smul.addr %s317, 4
          %s319 = scalar_lea.hbm %s1, %s318
          %s320 = sshll.u32 %s319, 4
          %s321 = int_to_ptr.hbm [resolvable:$true] %s320
          %s322 = sshll.u32 %s314, 4
          %s323 = int_to_ptr.vmem [resolvable:$true] %s322
          %328 = dma.hbm_to_vmem [thread:$0]  %s321, 128, %s323, %s311, 64, 64, 4
        $region32: #{tpu_custom_call.1} parent=23 // pred_fallthru
          _
        // Predicated region
        $region33: #{tpu_custom_call.1} parent=23 // pred_check
          %p329 = pneg %p111
        $region34: #{tpu_custom_call.1} parent=23 // pred_check_branch
          %331 = sbr.rel (%p329) target = $region36
        $region35: #{tpu_custom_call.1} parent=23 // pred_region
          %p332 = scmp.lt.s32.totalorder %s35, 1
          %s333 = scalar_select %p332, %s35, 1
          %s334 = smul.addr %s333, 12
          %s335 = smul.addr %s334, 4
          %s336 = scalar_lea.vmem %s2, %s335
        $region36: #{tpu_custom_call.1} parent=23 // pred_fallthru
          _
        // Predicated region
        $region37: #{tpu_custom_call.1} parent=23 // pred_check
          %p337 = pneg %p137
        $region38: #{tpu_custom_call.1} parent=23 // pred_check_branch
          %339 = sbr.rel (%p337) target = $region40
        $region39: #{tpu_custom_call.1} parent=23 // pred_region
          %p340 = scmp.lt.s32.totalorder %s35, 1
          %s341 = scalar_select %p340, %s35, 1
          %s342 = smul.addr %s341, 8
          %s343 = smul.addr %s342, 4
          %s344 = scalar_lea.vmem %s3, %s343
        $region40: #{tpu_custom_call.1} parent=23 // pred_fallthru
          _
        // Predicated region
        $region41: #{tpu_custom_call.1} parent=23 // pred_check
          %p345 = pneg %p163
        $region42: #{tpu_custom_call.1} parent=23 // pred_check_branch
          %347 = sbr.rel (%p345) target = $region44
        $region43: #{tpu_custom_call.1} parent=23 // pred_region
          %s348 = sand.u32 %s27, 1
          %s349 = scalar_lea.sflag [#allocation6], %s348
          %s350 = sand.u32 %s153, 1
          %s351 = smul.addr %s350, 5
          %s352 = scalar_lea.vmem [#allocation7], %s351
          %354 = vsyncadd %s349, 0
          %s355 = smul.addr %s35, 5
          %s356 = scalar_lea.hbm %s4, %s355
          %s358 = sshll.u32 %s356, 4
          %s359 = int_to_ptr.hbm [resolvable:$true] %s358
          %s360 = sshll.u32 %s352, 4
          %s361 = int_to_ptr.vmem [resolvable:$true] %s360
          %363 = dma.hbm_to_vmem [thread:$0]  %s359, 80, %s361, %s349
        $region44: #{tpu_custom_call.1} parent=23 // pred_fallthru
          _
      $region24: #{tpu_custom_call.1} parent=5 // pred_fallthru
        _
      %p364 = scmp.le.s32.totalorder 1, %s27
      %p365 = scmp.lt.s32.totalorder %s27, 5
      %p366 = pnand %p364, %p365
      %p367 = pneg %p366
      // Predicated region
      $region45: #{tpu_custom_call.1} parent=5 // pred_check
        _
      $region46: #{tpu_custom_call.1} parent=5 // pred_check_branch
        %369 = sbr.rel (%p366) target = $region48
      $region47: #{tpu_custom_call.1} parent=5 // pred_region
        %s370 = ssub.s32 %s27, 1
        %s371 = sand.u32 %s52, 1
        %s372 = scalar_lea.sflag [#allocation3], %s371
        %s373 = sand.u32 %s52, 1
        %s374 = smul.addr %s373, 8
        %s375 = scalar_lea.vmem [#allocation2], %s374
        // Predicated region
        $region49: #{tpu_custom_call.1} parent=47 // pred_check
          %p376 = pneg %p65
        $region50: #{tpu_custom_call.1} parent=47 // pred_check_branch
          %378 = sbr.rel (%p376) target = $region52
        $region51: #{tpu_custom_call.1} parent=47 // pred_region
          %380 = dma.done %s372, 128
        $region52: #{tpu_custom_call.1} parent=47 // pred_fallthru
          _
        %s381 = sand.u32 %s32, 1
        %s382 = scalar_lea.sflag [#allocation6], %s381
        %s383 = sand.u32 %s78, 1
        %s384 = smul.addr %s383, 8
        %s385 = scalar_lea.vmem [#allocation5], %s384
        // Predicated region
        $region53: #{tpu_custom_call.1} parent=47 // pred_check
          %p386 = pneg %p91
        $region54: #{tpu_custom_call.1} parent=47 // pred_check_branch
          %388 = sbr.rel (%p386) target = $region56
        $region55: #{tpu_custom_call.1} parent=47 // pred_region
          %390 = dma.done %s382, 128
        $region56: #{tpu_custom_call.1} parent=47 // pred_fallthru
          _
        %s391 = sand.u32 %s32, 1
        %s392 = scalar_lea.sflag [#allocation6], %s391
        %s393 = sand.u32 %s156, 1
        %s394 = smul.addr %s393, 5
        %s395 = scalar_lea.vmem [#allocation7], %s394
        // Predicated region
        $region57: #{tpu_custom_call.1} parent=47 // pred_check
          %p396 = pneg %p169
        $region58: #{tpu_custom_call.1} parent=47 // pred_check_branch
          %398 = sbr.rel (%p396) target = $region60
        $region59: #{tpu_custom_call.1} parent=47 // pred_region
          %400 = dma.done %s392, 80
        $region60: #{tpu_custom_call.1} parent=47 // pred_fallthru
          _
        %s401 = sand.u32 %s52, 1
        %s402 = scalar_lea.sflag [#allocation3], %s401
        %s403 = sand.u32 %s52, 1
        %s404 = smul.addr %s403, 8
        %s405 = scalar_lea.vmem [#allocation2], %s404
        %p406 = pneg %p65
        %p407 = pneg %p62
        %s408 = sand.u32 %s32, 1
        %s409 = scalar_lea.sflag [#allocation6], %s408
        %s410 = sand.u32 %s78, 1
        %s411 = smul.addr %s410, 8
        %s412 = scalar_lea.vmem [#allocation5], %s411
        %p413 = pneg %p91
        %p414 = pneg %p88
        %p415 = scmp.lt.s32.totalorder %s37, 1
        %s416 = scalar_select %p415, %s37, 1
        %s417 = smul.addr %s416, 12
        %s418 = smul.addr %s417, 4
        %s419 = scalar_lea.vmem %s2, %s418
        %p420 = pneg %p117
        %p421 = pneg %p114
        %p422 = scmp.lt.s32.totalorder %s37, 1
        %s423 = scalar_select %p422, %s37, 1
        %s424 = smul.addr %s423, 8
        %s425 = smul.addr %s424, 4
        %s426 = scalar_lea.vmem %s3, %s425
        %p427 = pneg %p143
        %p428 = pneg %p140
        %s429 = sand.u32 %s32, 1
        %s430 = scalar_lea.sflag [#allocation6], %s429
        %s431 = sand.u32 %s156, 1
        %s432 = smul.addr %s431, 5
        %s433 = scalar_lea.vmem [#allocation7], %s432
        %p434 = pneg %p169
        %p435 = pneg %p166
        %p436 = pneg %p190
        %p437 = pneg %p187
        %p438 = pneg %p211
        %p439 = pneg %p208
        %p440 = pneg %p237
        %p441 = pneg %p234
        %s442 = sand.u32 %s224, 1
        %s443 = scalar_lea.sflag [#allocation4], %s442
        %s444 = sand.u32 %s224, 1
        %s445 = smul.addr %s444, 8
        %s446 = scalar_lea.vmem [#allocation8], %s445
        %p447 = pneg %p263
        %p448 = pneg %p260
        %s449 = sand.u32 %s250, 1
        %s450 = scalar_lea.sflag [#allocation10], %s449
        %s451 = sand.u32 %s250, 1
        %s452 = smul.addr %s451, 8
        %s453 = scalar_lea.vmem [#allocation9], %s452
        %p454 = scmp.lt.s32.totalorder %s37, 1
        %s455 = scalar_select %p454, %s37, 1
        %s456 = smul.addr %s455, 12
        %s457 = smul.addr %s456, 4
        %s458 = scalar_lea.vmem %s2, %s457
        %p459 = scmp.lt.s32.totalorder %s37, 1
        %s460 = scalar_select %p459, %s37, 1
        %s461 = smul.addr %s460, 8
        %s462 = smul.addr %s461, 4
        %s463 = scalar_lea.vmem %s3, %s462
        %p465 = scmp.eq.s32.totalorder %s37, 0
        // Predicated region
        $region61: #{tpu_custom_call.1} parent=47 // pred_check
          %p466 = pneg %p465
        $region62: #{tpu_custom_call.1} parent=47 // pred_check_branch
          %468 = sbr.rel (%p466) target = $region64
        $region63: #{tpu_custom_call.1} parent=47 // pred_region
          %v469 = vld [vmem:[%s375] sm:$0xff]
          %vm470 = vcmask 261120
          %471 = vst.msk [vmem:[%s446] sm:$0xff] %vm470, %v469
        $region64: #{tpu_custom_call.1} parent=47 // pred_fallthru
          _
        %v472 = vld [vmem:[%s446] sm:$0xff]
        %v473 = vld [vmem:[%s385] sm:$0xf]
        %v474 = vld [vmem:[%s385 + $0x4] sm:$0xf]
        %v475 = vld [vmem:[%s458] sm:$0xf]
        %v476 = vld [vmem:[%s458 + $0xc] sm:$0xf]
        %v477 = vld [vmem:[%s458 + $0x18] sm:$0xf]
        %v478 = vld [vmem:[%s458 + $0x24] sm:$0xf]
        %v479 = vld [vmem:[%s458 + $0x4] sm:$0xf]
        %v480 = vld [vmem:[%s458 + $0x10] sm:$0xf]
        %v481 = vld [vmem:[%s458 + $0x1c] sm:$0xf]
        %v482 = vld [vmem:[%s458 + $0x28] sm:$0xf]
        %v483 = vld [vmem:[%s458 + $0x8] sm:$0xf]
        %v484 = vld [vmem:[%s458 + $0x14] sm:$0xf]
        %v485 = vld [vmem:[%s458 + $0x20] sm:$0xf]
        %v486 = vld [vmem:[%s458 + $0x2c] sm:$0xf]
        %v487 = vld [vmem:[%s463] sm:$0xf]
        %v488 = vld [vmem:[%s463 + $0x4] sm:$0xf]
        %v489 = vld [vmem:[%s463 + $0x8] sm:$0xf]
        %v490 = vld [vmem:[%s463 + $0xc] sm:$0xf]
        %v491 = vld [vmem:[%s463 + $0x10] sm:$0xf]
        %v492 = vld [vmem:[%s463 + $0x14] sm:$0xf]
        %v493 = vld [vmem:[%s463 + $0x18] sm:$0xf]
        %v494 = vld [vmem:[%s463 + $0x1c] sm:$0xf]
        %v495 = vld [vmem:[%s395] sm:$0x1]
        %v496 = vld [vmem:[%s395 + $0x1] sm:$0x1]
        %v497 = vld [vmem:[%s395 + $0x2] sm:$0x1]
        %v498 = vld [vmem:[%s395 + $0x3] sm:$0x1]
        %v499 = vld [vmem:[%s395 + $0x4] sm:$0x1]
        %v500 = vpack.c.bf16 %v472, %v472
        %v505 = vunpack.c.l.b16 %v475
        %v506 = vunpack.c.l.b16 %v476
        %v507 = vunpack.c.l.b16 %v477
        %v508 = vunpack.c.l.b16 %v478
        %v509 = vpack.c.b16 %v506, %v505
        %v510 = vpack.c.b16 %v508, %v507
        %vm513 = vcmask 261120
        %v515 = vsel %vm513, %v500, 0
        %517 = vmatpush.bf16.msra.mxu0 0
        %518 = vmatpush.bf16.msra.mxu0 0
        %519 = vmatpush.bf16.msra.mxu0 0
        %520 = vmatpush.bf16.msra.mxu0 0
        %521 = vmatpush.bf16.msra.mxu0 0
        %522 = vmatpush.bf16.msra.mxu0 0
        %523 = vmatpush.bf16.msra.mxu0 %v510
        %524 = vmatpush.bf16.msra.mxu0 %v509
        %525 = vmatmul.bf16.gmra.mxu0 %v515
        %v526 = vpop.f32.mrf.mxu0
        %v527 = vadd.f32 0.0, %v526
        %v528 = vpop.f32.mrf.mxu0
        %529 = vdwg.mxu0
        %v531 = vperm.slane %v495, 0
        %v533 = vadd.f32 %v527, %v531
        %535 = vrot.lane.b32.xlu0 %v533, 120
        %v536 = vpop.permute.xlu0 %535
        %538 = vrot.lane.b32.xlu0 %v533, 112
        %v539 = vpop.permute.xlu0 %538
        %541 = vrot.lane.b32.xlu0 %v533, 104
        %v542 = vpop.permute.xlu0 %541
        %v544 = vrot.slane %v539, 4
        %vm545 = vcmask 1047556
        %v546 = vsel %vm545, %v544, %v533
        %v547 = vrot.slane %v533, 4
        %v548 = vsel %vm545, %v539, %v547
        %v550 = vunpack.c.l.s4 1983009808
        %v551 = vunpack.c.0.s8 %v550
        %v552 = vperm.slane %v546, %v551
        %v554 = vunpack.c.l.s4 1983009808
        %v555 = vunpack.c.0.s8 %v554
        %v556 = vperm.slane %v548, %v555
        %v557 = vrot.slane %v542, 4
        %v558 = vsel %vm545, %v557, %v536
        %v559 = vrot.slane %v536, 4
        %v560 = vsel %vm545, %v542, %v559
        %v562 = vunpack.c.l.s4 1983009808
        %v563 = vunpack.c.0.s8 %v562
        %v564 = vperm.slane %v558, %v563
        %v566 = vunpack.c.l.s4 1983009808
        %v567 = vunpack.c.0.s8 %v566
        %v568 = vperm.slane %v560, %v567
        %v569 = vrot.slane %v564, 4
        %v570 = vsel %vm545, %v569, %v552
        %v571 = vrot.slane %v552, 4
        %v572 = vsel %vm545, %v564, %v571
        %v574 = vunpack.c.l.s4 1934713408
        %v575 = vunpack.c.0.s8 %v574
        %v576 = vperm.slane %v570, %v575
        %v578 = vunpack.c.l.s4 1934713408
        %v579 = vunpack.c.0.s8 %v578
        %v580 = vperm.slane %v572, %v579
        %v581 = vrot.slane %v568, 4
        %v582 = vsel %vm545, %v581, %v556
        %v583 = vrot.slane %v556, 4
        %v584 = vsel %vm545, %v568, %v583
        %v586 = vunpack.c.l.s4 1934713408
        %v587 = vunpack.c.0.s8 %v586
        %v588 = vperm.slane %v582, %v587
        %v590 = vunpack.c.l.s4 1934713408
        %v591 = vunpack.c.0.s8 %v590
        %v592 = vperm.slane %v584, %v591
        %v593 = vrot.slane %v576, 4
        %v594 = vsel %vm545, 0.0, %v593
        %v595 = vrot.slane %v580, 4
        %v596 = vsel %vm545, 0.0, %v595
        %v597 = vrot.slane %v588, 4
        %v598 = vsel %vm545, 0.0, %v597
        %v599 = vrot.slane %v592, 4
        %v600 = vsel %vm545, 0.0, %v599
        %v601 = vsel %vm545, %v595, %v576
        %v603 = vunpack.c.l.s4 1983009808
        %v604 = vunpack.c.0.s8 %v603
        %v605 = vperm.slane %v601, %v604
        %v606 = vrot.slane %v596, 4
        %v607 = vsel %vm545, %v606, %v594
        %v609 = vunpack.c.l.s4 1983009808
        %v610 = vunpack.c.0.s8 %v609
        %v611 = vperm.slane %v607, %v610
        %v612 = vsel %vm545, %v599, %v588
        %v614 = vunpack.c.l.s4 1983009808
        %v615 = vunpack.c.0.s8 %v614
        %v616 = vperm.slane %v612, %v615
        %v617 = vrot.slane %v600, 4
        %v618 = vsel %vm545, %v617, %v598
        %v620 = vunpack.c.l.s4 1983009808
        %v621 = vunpack.c.0.s8 %v620
        %v622 = vperm.slane %v618, %v621
        %v623 = vrot.slane %v611, 4
        %v624 = vsel %vm545, %v623, %v605
        %v625 = vrot.slane %v605, 4
        %v626 = vsel %vm545, %v611, %v625
        %v628 = vunpack.c.l.s4 1934713408
        %v629 = vunpack.c.0.s8 %v628
        %v630 = vperm.slane %v624, %v629
        %v632 = vunpack.c.l.s4 1934713408
        %v633 = vunpack.c.0.s8 %v632
        %v634 = vperm.slane %v626, %v633
        %v635 = vrot.slane %v622, 4
        %v636 = vsel %vm545, %v635, %v616
        %v637 = vrot.slane %v616, 4
        %v638 = vsel %vm545, %v622, %v637
        %v640 = vunpack.c.l.s4 1934713408
        %v641 = vunpack.c.0.s8 %v640
        %v642 = vperm.slane %v636, %v641
        %v644 = vunpack.c.l.s4 1934713408
        %v645 = vunpack.c.0.s8 %v644
        %v646 = vperm.slane %v638, %v645
        %v647 = vrot.slane %v642, 4
        %v648 = vsel %vm545, %v647, %v630
        %v649 = vrot.slane %v630, 4
        %v650 = vsel %vm545, %v642, %v649
        %v651 = vrot.slane %v646, 4
        %v652 = vsel %vm545, %v651, %v634
        %v653 = vrot.slane %v634, 4
        %v654 = vsel %vm545, %v646, %v653
        %v655 = vpack.c.bf16 %v648, %v648
        %v656 = vpack.c.bf16 %v650, %v650
        %v657 = vpack.c.bf16 %v652, %v652
        %v658 = vpack.c.bf16 %v654, %v654
        %659 = vrot.lane.b32.xlu0 %v533, 96
        %v660 = vpop.permute.xlu0 %659
        %661 = vrot.lane.b32.xlu0 %v536, 96
        %v662 = vpop.permute.xlu0 %661
        %663 = vrot.lane.b32.xlu0 %v539, 96
        %v664 = vpop.permute.xlu0 %663
        %665 = vrot.lane.b32.xlu0 %v542, 96
        %v666 = vpop.permute.xlu0 %665
        %v671 = vrot.slane %v664, 4
        %v672 = vsel %vm545, %v671, %v660
        %v673 = vrot.slane %v660, 4
        %v674 = vsel %vm545, %v664, %v673
        %v676 = vunpack.c.l.s4 1983009808
        %v677 = vunpack.c.0.s8 %v676
        %v678 = vperm.slane %v672, %v677
        %v680 = vunpack.c.l.s4 1983009808
        %v681 = vunpack.c.0.s8 %v680
        %v682 = vperm.slane %v674, %v681
        %v683 = vrot.slane %v666, 4
        %v684 = vsel %vm545, %v683, %v662
        %v685 = vrot.slane %v662, 4
        %v686 = vsel %vm545, %v666, %v685
        %v688 = vunpack.c.l.s4 1983009808
        %v689 = vunpack.c.0.s8 %v688
        %v690 = vperm.slane %v684, %v689
        %v692 = vunpack.c.l.s4 1983009808
        %v693 = vunpack.c.0.s8 %v692
        %v694 = vperm.slane %v686, %v693
        %v695 = vrot.slane %v690, 4
        %v696 = vsel %vm545, %v695, %v678
        %v697 = vrot.slane %v678, 4
        %v698 = vsel %vm545, %v690, %v697
        %v700 = vunpack.c.l.s4 1934713408
        %v701 = vunpack.c.0.s8 %v700
        %v702 = vperm.slane %v696, %v701
        %v704 = vunpack.c.l.s4 1934713408
        %v705 = vunpack.c.0.s8 %v704
        %v706 = vperm.slane %v698, %v705
        %v707 = vrot.slane %v694, 4
        %v708 = vsel %vm545, %v707, %v682
        %v709 = vrot.slane %v682, 4
        %v710 = vsel %vm545, %v694, %v709
        %v712 = vunpack.c.l.s4 1934713408
        %v713 = vunpack.c.0.s8 %v712
        %v714 = vperm.slane %v708, %v713
        %v716 = vunpack.c.l.s4 1934713408
        %v717 = vunpack.c.0.s8 %v716
        %v718 = vperm.slane %v710, %v717
        %v719 = vrot.slane %v702, 4
        %v720 = vsel %vm545, 0.0, %v719
        %v721 = vrot.slane %v706, 4
        %v722 = vsel %vm545, 0.0, %v721
        %v723 = vrot.slane %v714, 4
        %v724 = vsel %vm545, 0.0, %v723
        %v725 = vrot.slane %v718, 4
        %v726 = vsel %vm545, 0.0, %v725
        %v727 = vsel %vm545, %v721, %v702
        %v729 = vunpack.c.l.s4 1983009808
        %v730 = vunpack.c.0.s8 %v729
        %v731 = vperm.slane %v727, %v730
        %v732 = vrot.slane %v722, 4
        %v733 = vsel %vm545, %v732, %v720
        %v735 = vunpack.c.l.s4 1983009808
        %v736 = vunpack.c.0.s8 %v735
        %v737 = vperm.slane %v733, %v736
        %v738 = vsel %vm545, %v725, %v714
        %v740 = vunpack.c.l.s4 1983009808
        %v741 = vunpack.c.0.s8 %v740
        %v742 = vperm.slane %v738, %v741
        %v743 = vrot.slane %v726, 4
        %v744 = vsel %vm545, %v743, %v724
        %v746 = vunpack.c.l.s4 1983009808
        %v747 = vunpack.c.0.s8 %v746
        %v748 = vperm.slane %v744, %v747
        %v749 = vrot.slane %v737, 4
        %v750 = vsel %vm545, %v749, %v731
        %v751 = vrot.slane %v731, 4
        %v752 = vsel %vm545, %v737, %v751
        %v754 = vunpack.c.l.s4 1934713408
        %v755 = vunpack.c.0.s8 %v754
        %v756 = vperm.slane %v750, %v755
        %v758 = vunpack.c.l.s4 1934713408
        %v759 = vunpack.c.0.s8 %v758
        %v760 = vperm.slane %v752, %v759
        %v761 = vrot.slane %v748, 4
        %v762 = vsel %vm545, %v761, %v742
        %v763 = vrot.slane %v742, 4
        %v764 = vsel %vm545, %v748, %v763
        %v766 = vunpack.c.l.s4 1934713408
        %v767 = vunpack.c.0.s8 %v766
        %v768 = vperm.slane %v762, %v767
        %v770 = vunpack.c.l.s4 1934713408
        %v771 = vunpack.c.0.s8 %v770
        %v772 = vperm.slane %v764, %v771
        %v773 = vrot.slane %v768, 4
        %v774 = vsel %vm545, %v773, %v756
        %v775 = vrot.slane %v756, 4
        %v776 = vsel %vm545, %v768, %v775
        %v777 = vrot.slane %v772, 4
        %v778 = vsel %vm545, %v777, %v760
        %v779 = vrot.slane %v760, 4
        %v780 = vsel %vm545, %v772, %v779
        %v781 = vpack.c.bf16 %v774, %v774
        %v782 = vpack.c.bf16 %v776, %v776
        %v783 = vpack.c.bf16 %v778, %v778
        %v784 = vpack.c.bf16 %v780, %v780
        %785 = vrot.lane.b32.xlu0 %v533, 64
        %v786 = vpop.permute.xlu0 %785
        %787 = vrot.lane.b32.xlu0 %v536, 64
        %v788 = vpop.permute.xlu0 %787
        %789 = vrot.lane.b32.xlu0 %v539, 64
        %v790 = vpop.permute.xlu0 %789
        %791 = vrot.lane.b32.xlu0 %v542, 64
        %v792 = vpop.permute.xlu0 %791
        %v797 = vrot.slane %v790, 4
        %v798 = vsel %vm545, %v797, %v786
        %v799 = vrot.slane %v786, 4
        %v800 = vsel %vm545, %v790, %v799
        %v802 = vunpack.c.l.s4 1983009808
        %v803 = vunpack.c.0.s8 %v802
        %v804 = vperm.slane %v798, %v803
        %v806 = vunpack.c.l.s4 1983009808
        %v807 = vunpack.c.0.s8 %v806
        %v808 = vperm.slane %v800, %v807
        %v809 = vrot.slane %v792, 4
        %v810 = vsel %vm545, %v809, %v788
        %v811 = vrot.slane %v788, 4
        %v812 = vsel %vm545, %v792, %v811
        %v814 = vunpack.c.l.s4 1983009808
        %v815 = vunpack.c.0.s8 %v814
        %v816 = vperm.slane %v810, %v815
        %v818 = vunpack.c.l.s4 1983009808
        %v819 = vunpack.c.0.s8 %v818
        %v820 = vperm.slane %v812, %v819
        %v821 = vrot.slane %v816, 4
        %v822 = vsel %vm545, %v821, %v804
        %v823 = vrot.slane %v804, 4
        %v824 = vsel %vm545, %v816, %v823
        %v826 = vunpack.c.l.s4 1934713408
        %v827 = vunpack.c.0.s8 %v826
        %v828 = vperm.slane %v822, %v827
        %v830 = vunpack.c.l.s4 1934713408
        %v831 = vunpack.c.0.s8 %v830
        %v832 = vperm.slane %v824, %v831
        %v833 = vrot.slane %v820, 4
        %v834 = vsel %vm545, %v833, %v808
        %v835 = vrot.slane %v808, 4
        %v836 = vsel %vm545, %v820, %v835
        %v838 = vunpack.c.l.s4 1934713408
        %v839 = vunpack.c.0.s8 %v838
        %v840 = vperm.slane %v834, %v839
        %v842 = vunpack.c.l.s4 1934713408
        %v843 = vunpack.c.0.s8 %v842
        %v844 = vperm.slane %v836, %v843
        %v845 = vrot.slane %v828, 4
        %v846 = vsel %vm545, 0.0, %v845
        %v847 = vrot.slane %v832, 4
        %v848 = vsel %vm545, 0.0, %v847
        %v849 = vrot.slane %v840, 4
        %v850 = vsel %vm545, 0.0, %v849
        %v851 = vrot.slane %v844, 4
        %v852 = vsel %vm545, 0.0, %v851
        %v853 = vsel %vm545, %v847, %v828
        %v855 = vunpack.c.l.s4 1983009808
        %v856 = vunpack.c.0.s8 %v855
        %v857 = vperm.slane %v853, %v856
        %v858 = vrot.slane %v848, 4
        %v859 = vsel %vm545, %v858, %v846
        %v861 = vunpack.c.l.s4 1983009808
        %v862 = vunpack.c.0.s8 %v861
        %v863 = vperm.slane %v859, %v862
        %v864 = vsel %vm545, %v851, %v840
        %v866 = vunpack.c.l.s4 1983009808
        %v867 = vunpack.c.0.s8 %v866
        %v868 = vperm.slane %v864, %v867
        %v869 = vrot.slane %v852, 4
        %v870 = vsel %vm545, %v869, %v850
        %v872 = vunpack.c.l.s4 1983009808
        %v873 = vunpack.c.0.s8 %v872
        %v874 = vperm.slane %v870, %v873
        %v875 = vrot.slane %v863, 4
        %v876 = vsel %vm545, %v875, %v857
        %v877 = vrot.slane %v857, 4
        %v878 = vsel %vm545, %v863, %v877
        %v880 = vunpack.c.l.s4 1934713408
        %v881 = vunpack.c.0.s8 %v880
        %v882 = vperm.slane %v876, %v881
        %v884 = vunpack.c.l.s4 1934713408
        %v885 = vunpack.c.0.s8 %v884
        %v886 = vperm.slane %v878, %v885
        %v887 = vrot.slane %v874, 4
        %v888 = vsel %vm545, %v887, %v868
        %v889 = vrot.slane %v868, 4
        %v890 = vsel %vm545, %v874, %v889
        %v892 = vunpack.c.l.s4 1934713408
        %v893 = vunpack.c.0.s8 %v892
        %v894 = vperm.slane %v888, %v893
        %v896 = vunpack.c.l.s4 1934713408
        %v897 = vunpack.c.0.s8 %v896
        %v898 = vperm.slane %v890, %v897
        %v899 = vrot.slane %v894, 4
        %v900 = vsel %vm545, %v899, %v882
        %v901 = vrot.slane %v882, 4
        %v902 = vsel %vm545, %v894, %v901
        %v903 = vrot.slane %v898, 4
        %v904 = vsel %vm545, %v903, %v886
        %v905 = vrot.slane %v886, 4
        %v906 = vsel %vm545, %v898, %v905
        %v907 = vpack.c.bf16 %v900, %v900
        %v908 = vpack.c.bf16 %v902, %v902
        %v909 = vpack.c.bf16 %v904, %v904
        %v910 = vpack.c.bf16 %v906, %v906
        %vm911 = vcmask 64512
        %v913 = vsel %vm911, %v655, 0
        %v916 = vsel %vm911, %v781, 0
        %918 = vmatpush.bf16.xpose.msra.mxu0 0
        %919 = vmatpush.bf16.xpose.msra.mxu0 0
        %920 = vmatpush.bf16.xpose.msra.mxu0 0
        %921 = vmatpush.bf16.xpose.msra.mxu0 0
        %922 = vmatpush.bf16.xpose.msra.mxu0 0
        %923 = vmatpush.bf16.xpose.msra.mxu0 0
        %924 = vmatpush.bf16.xpose.msra.mxu0 0
        %925 = vmatpush.bf16.xpose.msra.mxu0 %v916
        %926 = vmatmul.bf16.gmra.mxu0 %v913
        %v927 = vpop.f32.mrf.mxu0
        %v928 = vadd.f32 0.0, %v927
        %v929 = vpop.f32.mrf.mxu0
        %930 = vdwg.mxu0
        %v932 = vsel %vm911, %v656, 0
        %v935 = vsel %vm911, %v782, 0
        %937 = vmatpush.bf16.xpose.msra.mxu0 0
        %938 = vmatpush.bf16.xpose.msra.mxu0 0
        %939 = vmatpush.bf16.xpose.msra.mxu0 0
        %940 = vmatpush.bf16.xpose.msra.mxu0 0
        %941 = vmatpush.bf16.xpose.msra.mxu0 0
        %942 = vmatpush.bf16.xpose.msra.mxu0 0
        %943 = vmatpush.bf16.xpose.msra.mxu0 0
        %944 = vmatpush.bf16.xpose.msra.mxu0 %v935
        %945 = vmatmul.bf16.gmra.mxu0 %v932
        %v946 = vpop.f32.mrf.mxu0
        %v947 = vadd.f32 0.0, %v946
        %v948 = vpop.f32.mrf.mxu0
        %949 = vdwg.mxu0
        %v951 = vsel %vm911, %v657, 0
        %v954 = vsel %vm911, %v783, 0
        %956 = vmatpush.bf16.xpose.msra.mxu0 0
        %957 = vmatpush.bf16.xpose.msra.mxu0 0
        %958 = vmatpush.bf16.xpose.msra.mxu0 0
        %959 = vmatpush.bf16.xpose.msra.mxu0 0
        %960 = vmatpush.bf16.xpose.msra.mxu0 0
        %961 = vmatpush.bf16.xpose.msra.mxu0 0
        %962 = vmatpush.bf16.xpose.msra.mxu0 0
        %963 = vmatpush.bf16.xpose.msra.mxu0 %v954
        %964 = vmatmul.bf16.gmra.mxu0 %v951
        %v965 = vpop.f32.mrf.mxu0
        %v966 = vadd.f32 0.0, %v965
        %v967 = vpop.f32.mrf.mxu0
        %968 = vdwg.mxu0
        %v970 = vsel %vm911, %v658, 0
        %v973 = vsel %vm911, %v784, 0
        %975 = vmatpush.bf16.xpose.msra.mxu0 0
        %976 = vmatpush.bf16.xpose.msra.mxu0 0
        %977 = vmatpush.bf16.xpose.msra.mxu0 0
        %978 = vmatpush.bf16.xpose.msra.mxu0 0
        %979 = vmatpush.bf16.xpose.msra.mxu0 0
        %980 = vmatpush.bf16.xpose.msra.mxu0 0
        %981 = vmatpush.bf16.xpose.msra.mxu0 0
        %982 = vmatpush.bf16.xpose.msra.mxu0 %v973
        %983 = vmatmul.bf16.gmra.mxu0 %v970
        %v984 = vpop.f32.mrf.mxu0
        %v985 = vadd.f32 0.0, %v984
        %v986 = vpop.f32.mrf.mxu0
        %987 = vdwg.mxu0
        %v988 = vsel %vm911, %v928, -inf
        %989 = vmax.xlane.f32.xlu0 %v988
        %v990 = vpop.xlane.xlu0 %989
        %v991 = vsel %vm911, %v947, -inf
        %992 = vmax.xlane.f32.xlu0 %v991
        %v993 = vpop.xlane.xlu0 %992
        %v994 = vsel %vm911, %v966, -inf
        %995 = vmax.xlane.f32.xlu0 %v994
        %v996 = vpop.xlane.xlu0 %995
        %v997 = vsel %vm911, %v985, -inf
        %998 = vmax.xlane.f32.xlu0 %v997
        %v999 = vpop.xlane.xlu0 %998
        %v1000 = vsub.f32 %v928, %v990
        %v1001 = vsub.f32 %v947, %v993
        %v1002 = vsub.f32 %v966, %v996
        %v1003 = vsub.f32 %v985, %v999
        %v1004 = vmul.f32 %v1000, 1.442695
        %v1005 = vpow.pop %v1004
        %v1006 = vmul.f32 %v1001, 1.442695
        %v1007 = vpow.pop %v1006
        %v1008 = vmul.f32 %v1002, 1.442695
        %v1009 = vpow.pop %v1008
        %v1010 = vmul.f32 %v1003, 1.442695
        %v1011 = vpow.pop %v1010
        %v1012 = vsel %vm911, %v1005, 0.0
        %1013 = vadd.xlane.f32.xlu0 %v1012
        %v1014 = vpop.xlane.xlu0 %1013
        %v1015 = vsel %vm911, %v1007, 0.0
        %1016 = vadd.xlane.f32.xlu0 %v1015
        %v1017 = vpop.xlane.xlu0 %1016
        %v1018 = vsel %vm911, %v1009, 0.0
        %1019 = vadd.xlane.f32.xlu0 %v1018
        %v1020 = vpop.xlane.xlu0 %1019
        %v1021 = vsel %vm911, %v1011, 0.0
        %1022 = vadd.xlane.f32.xlu0 %v1021
        %v1023 = vpop.xlane.xlu0 %1022
        %v1024 = vrcp.pop %v1014
        %v1025 = vrcp.pop %v1017
        %v1026 = vrcp.pop %v1020
        %v1027 = vrcp.pop %v1023
        %v1028 = vmul.f32 %v1005, %v1024
        %v1029 = vmul.f32 %v1007, %v1025
        %v1030 = vmul.f32 %v1009, %v1026
        %v1031 = vmul.f32 %v1011, %v1027
        %v1032 = vpack.c.bf16 %v1028, %v1028
        %v1033 = vpack.c.bf16 %v1029, %v1029
        %v1034 = vpack.c.bf16 %v1030, %v1030
        %v1035 = vpack.c.bf16 %v1031, %v1031
        %v1037 = vsel %vm911, %v1032, 0
        %vm1039 = vcmask 1043456
        %v1041 = vsel %vm1039, %v907, 0
        %1043 = vmatpush.bf16.msra.mxu0 0
        %1044 = vmatpush.bf16.msra.mxu0 0
        %1045 = vmatpush.bf16.msra.mxu0 0
        %1046 = vmatpush.bf16.msra.mxu0 0
        %1047 = vmatpush.bf16.msra.mxu0 0
        %1048 = vmatpush.bf16.msra.mxu0 0
        %1049 = vmatpush.bf16.msra.mxu0 0
        %1050 = vmatpush.bf16.msra.mxu0 %v1041
        %1051 = vmatmul.bf16.gmra.mxu0 %v1037
        %v1052 = vpop.f32.mrf.mxu0
        %v1053 = vadd.f32 0.0, %v1052
        %v1054 = vpop.f32.mrf.mxu0
        %1055 = vdwg.mxu0
        %v1057 = vsel %vm911, %v1033, 0
        %v1060 = vsel %vm1039, %v908, 0
        %1062 = vmatpush.bf16.msra.mxu0 0
        %1063 = vmatpush.bf16.msra.mxu0 0
        %1064 = vmatpush.bf16.msra.mxu0 0
        %1065 = vmatpush.bf16.msra.mxu0 0
        %1066 = vmatpush.bf16.msra.mxu0 0
        %1067 = vmatpush.bf16.msra.mxu0 0
        %1068 = vmatpush.bf16.msra.mxu0 0
        %1069 = vmatpush.bf16.msra.mxu0 %v1060
        %1070 = vmatmul.bf16.gmra.mxu0 %v1057
        %v1071 = vpop.f32.mrf.mxu0
        %v1072 = vadd.f32 0.0, %v1071
        %v1073 = vpop.f32.mrf.mxu0
        %1074 = vdwg.mxu0
        %v1076 = vsel %vm911, %v1034, 0
        %v1079 = vsel %vm1039, %v909, 0
        %1081 = vmatpush.bf16.msra.mxu0 0
        %1082 = vmatpush.bf16.msra.mxu0 0
        %1083 = vmatpush.bf16.msra.mxu0 0
        %1084 = vmatpush.bf16.msra.mxu0 0
        %1085 = vmatpush.bf16.msra.mxu0 0
        %1086 = vmatpush.bf16.msra.mxu0 0
        %1087 = vmatpush.bf16.msra.mxu0 0
        %1088 = vmatpush.bf16.msra.mxu0 %v1079
        %1089 = vmatmul.bf16.gmra.mxu0 %v1076
        %v1090 = vpop.f32.mrf.mxu0
        %v1091 = vadd.f32 0.0, %v1090
        %v1092 = vpop.f32.mrf.mxu0
        %1093 = vdwg.mxu0
        %v1095 = vsel %vm911, %v1035, 0
        %v1098 = vsel %vm1039, %v910, 0
        %1100 = vmatpush.bf16.msra.mxu0 0
        %1101 = vmatpush.bf16.msra.mxu0 0
        %1102 = vmatpush.bf16.msra.mxu0 0
        %1103 = vmatpush.bf16.msra.mxu0 0
        %1104 = vmatpush.bf16.msra.mxu0 0
        %1105 = vmatpush.bf16.msra.mxu0 0
        %1106 = vmatpush.bf16.msra.mxu0 0
        %1107 = vmatpush.bf16.msra.mxu0 %v1098
        %1108 = vmatmul.bf16.gmra.mxu0 %v1095
        %v1109 = vpop.f32.mrf.mxu0
        %v1110 = vadd.f32 0.0, %v1109
        %v1111 = vpop.f32.mrf.mxu0
        %1112 = vdwg.mxu0
        %v1113 = vrot.slane %v1091, 4
        %v1114 = vsel %vm545, %v1113, %v1053
        %v1115 = vrot.slane %v1053, 4
        %v1116 = vsel %vm545, %v1091, %v1115
        %v1118 = vunpack.c.l.s4 1983009808
        %v1119 = vunpack.c.0.s8 %v1118
        %v1120 = vperm.slane %v1114, %v1119
        %v1122 = vunpack.c.l.s4 1983009808
        %v1123 = vunpack.c.0.s8 %v1122
        %v1124 = vperm.slane %v1116, %v1123
        %v1125 = vrot.slane %v1110, 4
        %v1126 = vsel %vm545, %v1125, %v1072
        %v1127 = vrot.slane %v1072, 4
        %v1128 = vsel %vm545, %v1110, %v1127
        %v1130 = vunpack.c.l.s4 1983009808
        %v1131 = vunpack.c.0.s8 %v1130
        %v1132 = vperm.slane %v1126, %v1131
        %v1134 = vunpack.c.l.s4 1983009808
        %v1135 = vunpack.c.0.s8 %v1134
        %v1136 = vperm.slane %v1128, %v1135
        %v1137 = vrot.slane %v1132, 4
        %v1138 = vsel %vm545, %v1137, %v1120
        %v1139 = vrot.slane %v1120, 4
        %v1140 = vsel %vm545, %v1132, %v1139
        %v1142 = vunpack.c.l.s4 1934713408
        %v1143 = vunpack.c.0.s8 %v1142
        %v1144 = vperm.slane %v1138, %v1143
        %v1146 = vunpack.c.l.s4 1934713408
        %v1147 = vunpack.c.0.s8 %v1146
        %v1148 = vperm.slane %v1140, %v1147
        %v1149 = vrot.slane %v1136, 4
        %v1150 = vsel %vm545, %v1149, %v1124
        %v1151 = vrot.slane %v1124, 4
        %v1152 = vsel %vm545, %v1136, %v1151
        %v1154 = vunpack.c.l.s4 1934713408
        %v1155 = vunpack.c.0.s8 %v1154
        %v1156 = vperm.slane %v1150, %v1155
        %v1158 = vunpack.c.l.s4 1934713408
        %v1159 = vunpack.c.0.s8 %v1158
        %v1160 = vperm.slane %v1152, %v1159
        %v1161 = vrot.slane %v1144, 4
        %v1162 = vsel %vm545, 0.0, %v1161
        %v1163 = vrot.slane %v1148, 4
        %v1164 = vsel %vm545, 0.0, %v1163
        %v1165 = vrot.slane %v1156, 4
        %v1166 = vsel %vm545, 0.0, %v1165
        %v1167 = vrot.slane %v1160, 4
        %v1168 = vsel %vm545, 0.0, %v1167
        %v1169 = vsel %vm545, %v1163, %v1144
        %v1171 = vunpack.c.l.s4 1983009808
        %v1172 = vunpack.c.0.s8 %v1171
        %v1173 = vperm.slane %v1169, %v1172
        %v1174 = vrot.slane %v1164, 4
        %v1175 = vsel %vm545, %v1174, %v1162
        %v1177 = vunpack.c.l.s4 1983009808
        %v1178 = vunpack.c.0.s8 %v1177
        %v1179 = vperm.slane %v1175, %v1178
        %v1180 = vsel %vm545, %v1167, %v1156
        %v1182 = vunpack.c.l.s4 1983009808
        %v1183 = vunpack.c.0.s8 %v1182
        %v1184 = vperm.slane %v1180, %v1183
        %v1185 = vrot.slane %v1168, 4
        %v1186 = vsel %vm545, %v1185, %v1166
        %v1188 = vunpack.c.l.s4 1983009808
        %v1189 = vunpack.c.0.s8 %v1188
        %v1190 = vperm.slane %v1186, %v1189
        %v1191 = vrot.slane %v1179, 4
        %v1192 = vsel %vm545, %v1191, %v1173
        %v1193 = vrot.slane %v1173, 4
        %v1194 = vsel %vm545, %v1179, %v1193
        %v1196 = vunpack.c.l.s4 1934713408
        %v1197 = vunpack.c.0.s8 %v1196
        %v1198 = vperm.slane %v1192, %v1197
        %v1200 = vunpack.c.l.s4 1934713408
        %v1201 = vunpack.c.0.s8 %v1200
        %v1202 = vperm.slane %v1194, %v1201
        %v1203 = vrot.slane %v1190, 4
        %v1204 = vsel %vm545, %v1203, %v1184
        %v1205 = vrot.slane %v1184, 4
        %v1206 = vsel %vm545, %v1190, %v1205
        %v1208 = vunpack.c.l.s4 1934713408
        %v1209 = vunpack.c.0.s8 %v1208
        %v1210 = vperm.slane %v1204, %v1209
        %v1212 = vunpack.c.l.s4 1934713408
        %v1213 = vunpack.c.0.s8 %v1212
        %v1214 = vperm.slane %v1206, %v1213
        %v1215 = vrot.slane %v1210, 4
        %v1216 = vsel %vm545, %v1215, %v1198
        %v1217 = vrot.slane %v1198, 4
        %v1218 = vsel %vm545, %v1210, %v1217
        %v1219 = vrot.slane %v1214, 4
        %v1220 = vsel %vm545, %v1219, %v1202
        %v1221 = vrot.slane %v1202, 4
        %v1222 = vsel %vm545, %v1214, %v1221
        %1224 = vrot.lane.b32.xlu0 %v1218, 8
        %v1225 = vpop.permute.xlu0 %1224
        %1228 = vrot.lane.b32.xlu0 %v1220, 16
        %v1229 = vpop.permute.xlu0 %1228
        %1232 = vrot.lane.b32.xlu0 %v1222, 24
        %v1233 = vpop.permute.xlu0 %1232
        %v1235 = vsel %vm911, %v1216, %v1225
        %vm1236 = vcmask 130048
        %v1237 = vsel %vm1236, %v1235, %v1229
        %vm1238 = vcmask 195584
        %v1239 = vsel %vm1238, %v1237, %v1233
        %v1240 = vpack.c.bf16 %v1239, %v1239
        %1241 = vrot.lane.b32.xlu0 %v509, 32
        %v1242 = vpop.permute.xlu0 %1241
        %1243 = vrot.lane.b32.xlu0 %v510, 32
        %v1244 = vpop.permute.xlu0 %1243
        %v1248 = vsel %vm513, %v1240, 0
        %1250 = vmatpush.bf16.msra.mxu0 0
        %1251 = vmatpush.bf16.msra.mxu0 0
        %1252 = vmatpush.bf16.msra.mxu0 0
        %1253 = vmatpush.bf16.msra.mxu0 0
        %1254 = vmatpush.bf16.msra.mxu0 0
        %1255 = vmatpush.bf16.msra.mxu0 0
        %1256 = vmatpush.bf16.msra.mxu0 %v1244
        %1257 = vmatpush.bf16.msra.mxu0 %v1242
        %1258 = vmatmul.bf16.gmra.mxu0 %v1248
        %v1259 = vpop.f32.mrf.mxu0
        %v1260 = vadd.f32 0.0, %v1259
        %v1261 = vpop.f32.mrf.mxu0
        %1262 = vdwg.mxu0
        %1263 = vrot.lane.b32.xlu0 %v531, 32
        %v1264 = vpop.permute.xlu0 %1263
        %v1266 = vadd.f32 %v1260, %v1264
        %v1267 = vadd.f32 %v472, %v1266
        %v1268 = vsel %vm513, %v1267, 0.0
        %1269 = vadd.xlane.f32.xlu0 %v1268
        %v1270 = vpop.xlane.xlu0 %1269
        %v1271 = vrcp.pop 32.0
        %v1272 = vmul.f32 32.0, %v1271
        %v1273 = vsub.f32 1.0, %v1272
        %v1274 = vmul.f32 %v1271, %v1273
        %v1275 = vadd.f32 %v1271, %v1274
        %vm1276 = vweird.f32 %v1271
        %v1277 = vsel %vm1276, %v1271, %v1275
        %v1278 = vmul.f32 %v1270, %v1277
        %v1279 = vsub.f32 %v1267, %v1278
        %v1280 = vmul.f32 %v1279, %v1279
        %v1281 = vsel %vm513, %v1280, 0.0
        %1282 = vadd.xlane.f32.xlu0 %v1281
        %v1283 = vpop.xlane.xlu0 %1282
        %v1284 = vmul.f32 %v1283, %v1277
        %v1285 = vadd.f32 %v1284, 1e-05
        %v1286 = vrsqrt.pop %v1285
        %v1287 = vmul.f32 %v1286, %v1285
        %v1288 = vmul.f32 %v1287, %v1286
        %v1289 = vmul.f32 0.5, %v1288
        %v1290 = vsub.f32 1.5, %v1289
        %v1291 = vmul.f32 %v1286, %v1290
        %vm1292 = vweird.f32 %v1285
        %vm1293 = vweird.f32 %v1286
        %vm1294 = vmor %vm1292, %vm1293
        %v1295 = vsel %vm1294, %v1286, %v1291
        %v1296 = vmul.f32 %v1279, %v1295
        %v1298 = vperm.slane %v497, 0
        %1299 = vrot.lane.b32.xlu0 %v1298, 32
        %v1300 = vpop.permute.xlu0 %1299
        %v1302 = vmul.f32 %v1296, %v1300
        %v1304 = vperm.slane %v498, 0
        %v1306 = vadd.f32 %v1302, %v1304
        %v1307 = vpack.c.bf16 %v1306, %v1306
        %v1312 = vunpack.c.l.b16 %v479
        %v1313 = vunpack.c.l.b16 %v480
        %v1314 = vunpack.c.l.b16 %v481
        %v1315 = vunpack.c.l.b16 %v482
        %v1316 = vpack.c.b16 %v1313, %v1312
        %v1317 = vpack.c.b16 %v1315, %v1314
        %v1321 = vsel %vm513, %v1307, 0
        %1323 = vmatpush.bf16.msra.mxu0 0
        %1324 = vmatpush.bf16.msra.mxu0 0
        %1325 = vmatpush.bf16.msra.mxu0 0
        %1326 = vmatpush.bf16.msra.mxu0 0
        %1327 = vmatpush.bf16.msra.mxu0 0
        %1328 = vmatpush.bf16.msra.mxu0 0
        %1329 = vmatpush.bf16.msra.mxu0 %v1317
        %1330 = vmatpush.bf16.msra.mxu0 %v1316
        %1331 = vmatmul.bf16.gmra.mxu0 %v1321
        %v1332 = vpop.f32.mrf.mxu0
        %v1333 = vadd.f32 0.0, %v1332
        %v1334 = vpop.f32.mrf.mxu0
        %1335 = vdwg.mxu0
        %v1337 = vperm.slane %v496, 0
        %v1339 = vadd.f32 %v1333, %v1337
        %v1342 = vunpack.c.l.b16 %v473
        %v1343 = vunpack.c.l.b16 %v474
        %v1344 = vpack.c.b16 %v1343, %v1342
        %1345 = vrot.lane.b32.xlu0 %v1316, 96
        %v1346 = vpop.permute.xlu0 %1345
        %1347 = vrot.lane.b32.xlu0 %v1317, 96
        %v1348 = vpop.permute.xlu0 %1347
        %v1352 = vsel %vm513, %v1344, 0
        %1354 = vmatpush.bf16.msra.mxu0 0
        %1355 = vmatpush.bf16.msra.mxu0 0
        %1356 = vmatpush.bf16.msra.mxu0 0
        %1357 = vmatpush.bf16.msra.mxu0 0
        %1358 = vmatpush.bf16.msra.mxu0 0
        %1359 = vmatpush.bf16.msra.mxu0 0
        %1360 = vmatpush.bf16.msra.mxu0 %v1348
        %1361 = vmatpush.bf16.msra.mxu0 %v1346
        %1362 = vmatmul.bf16.gmra.mxu0 %v1352
        %v1363 = vpop.f32.mrf.mxu0
        %v1364 = vadd.f32 0.0, %v1363
        %v1365 = vpop.f32.mrf.mxu0
        %v1366 = vadd.f32 0.0, %v1365
        %1367 = vdwg.mxu0
        %1368 = vrot.lane.b32.xlu0 %v1337, 96
        %v1369 = vpop.permute.xlu0 %1368
        %v1371 = vadd.f32 %v1364, %v1369
        %v1372 = vadd.f32 %v1366, %v1369
        %1374 = vrot.lane.b32.xlu0 %v1339, 120
        %v1375 = vpop.permute.xlu0 %1374
        %1377 = vrot.lane.b32.xlu0 %v1339, 112
        %v1378 = vpop.permute.xlu0 %1377
        %1380 = vrot.lane.b32.xlu0 %v1339, 104
        %v1381 = vpop.permute.xlu0 %1380
        %v1383 = vrot.slane %v1378, 4
        %v1384 = vsel %vm545, %v1383, %v1339
        %v1385 = vrot.slane %v1339, 4
        %v1386 = vsel %vm545, %v1378, %v1385
        %v1388 = vunpack.c.l.s4 1983009808
        %v1389 = vunpack.c.0.s8 %v1388
        %v1390 = vperm.slane %v1384, %v1389
        %v1392 = vunpack.c.l.s4 1983009808
        %v1393 = vunpack.c.0.s8 %v1392
        %v1394 = vperm.slane %v1386, %v1393
        %v1395 = vrot.slane %v1381, 4
        %v1396 = vsel %vm545, %v1395, %v1375
        %v1397 = vrot.slane %v1375, 4
        %v1398 = vsel %vm545, %v1381, %v1397
        %v1400 = vunpack.c.l.s4 1983009808
        %v1401 = vunpack.c.0.s8 %v1400
        %v1402 = vperm.slane %v1396, %v1401
        %v1404 = vunpack.c.l.s4 1983009808
        %v1405 = vunpack.c.0.s8 %v1404
        %v1406 = vperm.slane %v1398, %v1405
        %v1407 = vrot.slane %v1402, 4
        %v1408 = vsel %vm545, %v1407, %v1390
        %v1409 = vrot.slane %v1390, 4
        %v1410 = vsel %vm545, %v1402, %v1409
        %v1412 = vunpack.c.l.s4 1934713408
        %v1413 = vunpack.c.0.s8 %v1412
        %v1414 = vperm.slane %v1408, %v1413
        %v1416 = vunpack.c.l.s4 1934713408
        %v1417 = vunpack.c.0.s8 %v1416
        %v1418 = vperm.slane %v1410, %v1417
        %v1419 = vrot.slane %v1406, 4
        %v1420 = vsel %vm545, %v1419, %v1394
        %v1421 = vrot.slane %v1394, 4
        %v1422 = vsel %vm545, %v1406, %v1421
        %v1424 = vunpack.c.l.s4 1934713408
        %v1425 = vunpack.c.0.s8 %v1424
        %v1426 = vperm.slane %v1420, %v1425
        %v1428 = vunpack.c.l.s4 1934713408
        %v1429 = vunpack.c.0.s8 %v1428
        %v1430 = vperm.slane %v1422, %v1429
        %v1431 = vrot.slane %v1414, 4
        %v1432 = vsel %vm545, 0.0, %v1431
        %v1433 = vrot.slane %v1418, 4
        %v1434 = vsel %vm545, 0.0, %v1433
        %v1435 = vrot.slane %v1426, 4
        %v1436 = vsel %vm545, 0.0, %v1435
        %v1437 = vrot.slane %v1430, 4
        %v1438 = vsel %vm545, 0.0, %v1437
        %v1439 = vsel %vm545, %v1433, %v1414
        %v1441 = vunpack.c.l.s4 1983009808
        %v1442 = vunpack.c.0.s8 %v1441
        %v1443 = vperm.slane %v1439, %v1442
        %v1444 = vrot.slane %v1434, 4
        %v1445 = vsel %vm545, %v1444, %v1432
        %v1447 = vunpack.c.l.s4 1983009808
        %v1448 = vunpack.c.0.s8 %v1447
        %v1449 = vperm.slane %v1445, %v1448
        %v1450 = vsel %vm545, %v1437, %v1426
        %v1452 = vunpack.c.l.s4 1983009808
        %v1453 = vunpack.c.0.s8 %v1452
        %v1454 = vperm.slane %v1450, %v1453
        %v1455 = vrot.slane %v1438, 4
        %v1456 = vsel %vm545, %v1455, %v1436
        %v1458 = vunpack.c.l.s4 1983009808
        %v1459 = vunpack.c.0.s8 %v1458
        %v1460 = vperm.slane %v1456, %v1459
        %v1461 = vrot.slane %v1449, 4
        %v1462 = vsel %vm545, %v1461, %v1443
        %v1463 = vrot.slane %v1443, 4
        %v1464 = vsel %vm545, %v1449, %v1463
        %v1466 = vunpack.c.l.s4 1934713408
        %v1467 = vunpack.c.0.s8 %v1466
        %v1468 = vperm.slane %v1462, %v1467
        %v1470 = vunpack.c.l.s4 1934713408
        %v1471 = vunpack.c.0.s8 %v1470
        %v1472 = vperm.slane %v1464, %v1471
        %v1473 = vrot.slane %v1460, 4
        %v1474 = vsel %vm545, %v1473, %v1454
        %v1475 = vrot.slane %v1454, 4
        %v1476 = vsel %vm545, %v1460, %v1475
        %v1478 = vunpack.c.l.s4 1934713408
        %v1479 = vunpack.c.0.s8 %v1478
        %v1480 = vperm.slane %v1474, %v1479
        %v1482 = vunpack.c.l.s4 1934713408
        %v1483 = vunpack.c.0.s8 %v1482
        %v1484 = vperm.slane %v1476, %v1483
        %v1485 = vrot.slane %v1480, 4
        %v1486 = vsel %vm545, %v1485, %v1468
        %v1487 = vrot.slane %v1468, 4
        %v1488 = vsel %vm545, %v1480, %v1487
        %v1489 = vrot.slane %v1484, 4
        %v1490 = vsel %vm545, %v1489, %v1472
        %v1491 = vrot.slane %v1472, 4
        %v1492 = vsel %vm545, %v1484, %v1491
        %v1493 = vpack.c.bf16 %v1486, %v1486
        %v1494 = vpack.c.bf16 %v1488, %v1488
        %v1495 = vpack.c.bf16 %v1490, %v1490
        %v1496 = vpack.c.bf16 %v1492, %v1492
        %1499 = vrot.lane.b32.xlu0 %v1371, 120
        %v1500 = vpop.permute.xlu0 %1499
        %1501 = vrot.lane.b32.xlu0 %v1372, 120
        %v1502 = vpop.permute.xlu0 %1501
        %1505 = vrot.lane.b32.xlu0 %v1371, 112
        %v1506 = vpop.permute.xlu0 %1505
        %1507 = vrot.lane.b32.xlu0 %v1372, 112
        %v1508 = vpop.permute.xlu0 %1507
        %1511 = vrot.lane.b32.xlu0 %v1371, 104
        %v1512 = vpop.permute.xlu0 %1511
        %1513 = vrot.lane.b32.xlu0 %v1372, 104
        %v1514 = vpop.permute.xlu0 %1513
        %v1517 = vrot.slane %v1506, 4
        %v1518 = vsel %vm545, %v1517, %v1371
        %v1519 = vrot.slane %v1371, 4
        %v1520 = vsel %vm545, %v1506, %v1519
        %v1522 = vunpack.c.l.s4 1983009808
        %v1523 = vunpack.c.0.s8 %v1522
        %v1524 = vperm.slane %v1518, %v1523
        %v1526 = vunpack.c.l.s4 1983009808
        %v1527 = vunpack.c.0.s8 %v1526
        %v1528 = vperm.slane %v1520, %v1527
        %v1529 = vrot.slane %v1512, 4
        %v1530 = vsel %vm545, %v1529, %v1500
        %v1531 = vrot.slane %v1500, 4
        %v1532 = vsel %vm545, %v1512, %v1531
        %v1534 = vunpack.c.l.s4 1983009808
        %v1535 = vunpack.c.0.s8 %v1534
        %v1536 = vperm.slane %v1530, %v1535
        %v1538 = vunpack.c.l.s4 1983009808
        %v1539 = vunpack.c.0.s8 %v1538
        %v1540 = vperm.slane %v1532, %v1539
        %v1541 = vrot.slane %v1536, 4
        %v1542 = vsel %vm545, %v1541, %v1524
        %v1543 = vrot.slane %v1524, 4
        %v1544 = vsel %vm545, %v1536, %v1543
        %v1546 = vunpack.c.l.s4 1934713408
        %v1547 = vunpack.c.0.s8 %v1546
        %v1548 = vperm.slane %v1542, %v1547
        %v1550 = vunpack.c.l.s4 1934713408
        %v1551 = vunpack.c.0.s8 %v1550
        %v1552 = vperm.slane %v1544, %v1551
        %v1553 = vrot.slane %v1540, 4
        %v1554 = vsel %vm545, %v1553, %v1528
        %v1555 = vrot.slane %v1528, 4
        %v1556 = vsel %vm545, %v1540, %v1555
        %v1558 = vunpack.c.l.s4 1934713408
        %v1559 = vunpack.c.0.s8 %v1558
        %v1560 = vperm.slane %v1554, %v1559
        %v1562 = vunpack.c.l.s4 1934713408
        %v1563 = vunpack.c.0.s8 %v1562
        %v1564 = vperm.slane %v1556, %v1563
        %v1565 = vrot.slane %v1548, 4
        %v1566 = vsel %vm545, 0.0, %v1565
        %v1567 = vrot.slane %v1552, 4
        %v1568 = vsel %vm545, 0.0, %v1567
        %v1569 = vrot.slane %v1560, 4
        %v1570 = vsel %vm545, 0.0, %v1569
        %v1571 = vrot.slane %v1564, 4
        %v1572 = vsel %vm545, 0.0, %v1571
        %v1573 = vrot.slane %v1508, 4
        %v1574 = vsel %vm545, %v1573, %v1372
        %v1575 = vrot.slane %v1372, 4
        %v1576 = vsel %vm545, %v1508, %v1575
        %v1578 = vunpack.c.l.s4 1983009808
        %v1579 = vunpack.c.0.s8 %v1578
        %v1580 = vperm.slane %v1574, %v1579
        %v1582 = vunpack.c.l.s4 1983009808
        %v1583 = vunpack.c.0.s8 %v1582
        %v1584 = vperm.slane %v1576, %v1583
        %v1585 = vrot.slane %v1514, 4
        %v1586 = vsel %vm545, %v1585, %v1502
        %v1587 = vrot.slane %v1502, 4
        %v1588 = vsel %vm545, %v1514, %v1587
        %v1590 = vunpack.c.l.s4 1983009808
        %v1591 = vunpack.c.0.s8 %v1590
        %v1592 = vperm.slane %v1586, %v1591
        %v1594 = vunpack.c.l.s4 1983009808
        %v1595 = vunpack.c.0.s8 %v1594
        %v1596 = vperm.slane %v1588, %v1595
        %v1597 = vrot.slane %v1592, 4
        %v1598 = vsel %vm545, %v1597, %v1580
        %v1599 = vrot.slane %v1580, 4
        %v1600 = vsel %vm545, %v1592, %v1599
        %v1602 = vunpack.c.l.s4 1934713408
        %v1603 = vunpack.c.0.s8 %v1602
        %v1604 = vperm.slane %v1598, %v1603
        %v1606 = vunpack.c.l.s4 1934713408
        %v1607 = vunpack.c.0.s8 %v1606
        %v1608 = vperm.slane %v1600, %v1607
        %v1609 = vrot.slane %v1596, 4
        %v1610 = vsel %vm545, %v1609, %v1584
        %v1611 = vrot.slane %v1584, 4
        %v1612 = vsel %vm545, %v1596, %v1611
        %v1614 = vunpack.c.l.s4 1934713408
        %v1615 = vunpack.c.0.s8 %v1614
        %v1616 = vperm.slane %v1610, %v1615
        %v1618 = vunpack.c.l.s4 1934713408
        %v1619 = vunpack.c.0.s8 %v1618
        %v1620 = vperm.slane %v1612, %v1619
        %v1621 = vrot.slane %v1604, 4
        %v1622 = vsel %vm545, 0.0, %v1621
        %v1623 = vrot.slane %v1608, 4
        %v1624 = vsel %vm545, 0.0, %v1623
        %v1625 = vrot.slane %v1616, 4
        %v1626 = vsel %vm545, 0.0, %v1625
        %v1627 = vrot.slane %v1620, 4
        %v1628 = vsel %vm545, 0.0, %v1627
        %v1629 = vsel %vm545, %v1567, %v1548
        %v1631 = vunpack.c.l.s4 1983009808
        %v1632 = vunpack.c.0.s8 %v1631
        %v1633 = vperm.slane %v1629, %v1632
        %v1634 = vrot.slane %v1568, 4
        %v1635 = vsel %vm545, %v1634, %v1566
        %v1637 = vunpack.c.l.s4 1983009808
        %v1638 = vunpack.c.0.s8 %v1637
        %v1639 = vperm.slane %v1635, %v1638
        %v1640 = vsel %vm545, %v1571, %v1560
        %v1642 = vunpack.c.l.s4 1983009808
        %v1643 = vunpack.c.0.s8 %v1642
        %v1644 = vperm.slane %v1640, %v1643
        %v1645 = vrot.slane %v1572, 4
        %v1646 = vsel %vm545, %v1645, %v1570
        %v1648 = vunpack.c.l.s4 1983009808
        %v1649 = vunpack.c.0.s8 %v1648
        %v1650 = vperm.slane %v1646, %v1649
        %v1651 = vrot.slane %v1639, 4
        %v1652 = vsel %vm545, %v1651, %v1633
        %v1653 = vrot.slane %v1633, 4
        %v1654 = vsel %vm545, %v1639, %v1653
        %v1656 = vunpack.c.l.s4 1934713408
        %v1657 = vunpack.c.0.s8 %v1656
        %v1658 = vperm.slane %v1652, %v1657
        %v1660 = vunpack.c.l.s4 1934713408
        %v1661 = vunpack.c.0.s8 %v1660
        %v1662 = vperm.slane %v1654, %v1661
        %v1663 = vrot.slane %v1650, 4
        %v1664 = vsel %vm545, %v1663, %v1644
        %v1665 = vrot.slane %v1644, 4
        %v1666 = vsel %vm545, %v1650, %v1665
        %v1668 = vunpack.c.l.s4 1934713408
        %v1669 = vunpack.c.0.s8 %v1668
        %v1670 = vperm.slane %v1664, %v1669
        %v1672 = vunpack.c.l.s4 1934713408
        %v1673 = vunpack.c.0.s8 %v1672
        %v1674 = vperm.slane %v1666, %v1673
        %v1675 = vrot.slane %v1670, 4
        %v1676 = vsel %vm545, %v1675, %v1658
        %v1677 = vrot.slane %v1658, 4
        %v1678 = vsel %vm545, %v1670, %v1677
        %v1679 = vrot.slane %v1674, 4
        %v1680 = vsel %vm545, %v1679, %v1662
        %v1681 = vrot.slane %v1662, 4
        %v1682 = vsel %vm545, %v1674, %v1681
        %v1683 = vsel %vm545, %v1623, %v1604
        %v1685 = vunpack.c.l.s4 1983009808
        %v1686 = vunpack.c.0.s8 %v1685
        %v1687 = vperm.slane %v1683, %v1686
        %v1688 = vrot.slane %v1624, 4
        %v1689 = vsel %vm545, %v1688, %v1622
        %v1691 = vunpack.c.l.s4 1983009808
        %v1692 = vunpack.c.0.s8 %v1691
        %v1693 = vperm.slane %v1689, %v1692
        %v1694 = vsel %vm545, %v1627, %v1616
        %v1696 = vunpack.c.l.s4 1983009808
        %v1697 = vunpack.c.0.s8 %v1696
        %v1698 = vperm.slane %v1694, %v1697
        %v1699 = vrot.slane %v1628, 4
        %v1700 = vsel %vm545, %v1699, %v1626
        %v1702 = vunpack.c.l.s4 1983009808
        %v1703 = vunpack.c.0.s8 %v1702
        %v1704 = vperm.slane %v1700, %v1703
        %v1705 = vrot.slane %v1693, 4
        %v1706 = vsel %vm545, %v1705, %v1687
        %v1707 = vrot.slane %v1687, 4
        %v1708 = vsel %vm545, %v1693, %v1707
        %v1710 = vunpack.c.l.s4 1934713408
        %v1711 = vunpack.c.0.s8 %v1710
        %v1712 = vperm.slane %v1706, %v1711
        %v1714 = vunpack.c.l.s4 1934713408
        %v1715 = vunpack.c.0.s8 %v1714
        %v1716 = vperm.slane %v1708, %v1715
        %v1717 = vrot.slane %v1704, 4
        %v1718 = vsel %vm545, %v1717, %v1698
        %v1719 = vrot.slane %v1698, 4
        %v1720 = vsel %vm545, %v1704, %v1719
        %v1722 = vunpack.c.l.s4 1934713408
        %v1723 = vunpack.c.0.s8 %v1722
        %v1724 = vperm.slane %v1718, %v1723
        %v1726 = vunpack.c.l.s4 1934713408
        %v1727 = vunpack.c.0.s8 %v1726
        %v1728 = vperm.slane %v1720, %v1727
        %v1729 = vrot.slane %v1724, 4
        %v1730 = vsel %vm545, %v1729, %v1712
        %v1731 = vrot.slane %v1712, 4
        %v1732 = vsel %vm545, %v1724, %v1731
        %v1733 = vrot.slane %v1728, 4
        %v1734 = vsel %vm545, %v1733, %v1716
        %v1735 = vrot.slane %v1716, 4
        %v1736 = vsel %vm545, %v1728, %v1735
        %v1737 = vpack.c.bf16 %v1676, %v1676
        %v1738 = vpack.c.bf16 %v1730, %v1730
        %v1739 = vpack.c.bf16 %v1678, %v1678
        %v1740 = vpack.c.bf16 %v1732, %v1732
        %v1741 = vpack.c.bf16 %v1680, %v1680
        %v1742 = vpack.c.bf16 %v1734, %v1734
        %v1743 = vpack.c.bf16 %v1682, %v1682
        %v1744 = vpack.c.bf16 %v1736, %v1736
        %1745 = vrot.lane.b32.xlu0 %v1371, 96
        %v1746 = vpop.permute.xlu0 %1745
        %1747 = vrot.lane.b32.xlu0 %v1372, 96
        %v1748 = vpop.permute.xlu0 %1747
        %1749 = vrot.lane.b32.xlu0 %v1500, 96
        %v1750 = vpop.permute.xlu0 %1749
        %1751 = vrot.lane.b32.xlu0 %v1502, 96
        %v1752 = vpop.permute.xlu0 %1751
        %1753 = vrot.lane.b32.xlu0 %v1506, 96
        %v1754 = vpop.permute.xlu0 %1753
        %1755 = vrot.lane.b32.xlu0 %v1508, 96
        %v1756 = vpop.permute.xlu0 %1755
        %1757 = vrot.lane.b32.xlu0 %v1512, 96
        %v1758 = vpop.permute.xlu0 %1757
        %1759 = vrot.lane.b32.xlu0 %v1514, 96
        %v1760 = vpop.permute.xlu0 %1759
        %v1769 = vrot.slane %v1754, 4
        %v1770 = vsel %vm545, %v1769, %v1746
        %v1771 = vrot.slane %v1746, 4
        %v1772 = vsel %vm545, %v1754, %v1771
        %v1774 = vunpack.c.l.s4 1983009808
        %v1775 = vunpack.c.0.s8 %v1774
        %v1776 = vperm.slane %v1770, %v1775
        %v1778 = vunpack.c.l.s4 1983009808
        %v1779 = vunpack.c.0.s8 %v1778
        %v1780 = vperm.slane %v1772, %v1779
        %v1781 = vrot.slane %v1758, 4
        %v1782 = vsel %vm545, %v1781, %v1750
        %v1783 = vrot.slane %v1750, 4
        %v1784 = vsel %vm545, %v1758, %v1783
        %v1786 = vunpack.c.l.s4 1983009808
        %v1787 = vunpack.c.0.s8 %v1786
        %v1788 = vperm.slane %v1782, %v1787
        %v1790 = vunpack.c.l.s4 1983009808
        %v1791 = vunpack.c.0.s8 %v1790
        %v1792 = vperm.slane %v1784, %v1791
        %v1793 = vrot.slane %v1788, 4
        %v1794 = vsel %vm545, %v1793, %v1776
        %v1795 = vrot.slane %v1776, 4
        %v1796 = vsel %vm545, %v1788, %v1795
        %v1798 = vunpack.c.l.s4 1934713408
        %v1799 = vunpack.c.0.s8 %v1798
        %v1800 = vperm.slane %v1794, %v1799
        %v1802 = vunpack.c.l.s4 1934713408
        %v1803 = vunpack.c.0.s8 %v1802
        %v1804 = vperm.slane %v1796, %v1803
        %v1805 = vrot.slane %v1792, 4
        %v1806 = vsel %vm545, %v1805, %v1780
        %v1807 = vrot.slane %v1780, 4
        %v1808 = vsel %vm545, %v1792, %v1807
        %v1810 = vunpack.c.l.s4 1934713408
        %v1811 = vunpack.c.0.s8 %v1810
        %v1812 = vperm.slane %v1806, %v1811
        %v1814 = vunpack.c.l.s4 1934713408
        %v1815 = vunpack.c.0.s8 %v1814
        %v1816 = vperm.slane %v1808, %v1815
        %v1817 = vrot.slane %v1800, 4
        %v1818 = vsel %vm545, 0.0, %v1817
        %v1819 = vrot.slane %v1804, 4
        %v1820 = vsel %vm545, 0.0, %v1819
        %v1821 = vrot.slane %v1812, 4
        %v1822 = vsel %vm545, 0.0, %v1821
        %v1823 = vrot.slane %v1816, 4
        %v1824 = vsel %vm545, 0.0, %v1823
        %v1825 = vrot.slane %v1756, 4
        %v1826 = vsel %vm545, %v1825, %v1748
        %v1827 = vrot.slane %v1748, 4
        %v1828 = vsel %vm545, %v1756, %v1827
        %v1830 = vunpack.c.l.s4 1983009808
        %v1831 = vunpack.c.0.s8 %v1830
        %v1832 = vperm.slane %v1826, %v1831
        %v1834 = vunpack.c.l.s4 1983009808
        %v1835 = vunpack.c.0.s8 %v1834
        %v1836 = vperm.slane %v1828, %v1835
        %v1837 = vrot.slane %v1760, 4
        %v1838 = vsel %vm545, %v1837, %v1752
        %v1839 = vrot.slane %v1752, 4
        %v1840 = vsel %vm545, %v1760, %v1839
        %v1842 = vunpack.c.l.s4 1983009808
        %v1843 = vunpack.c.0.s8 %v1842
        %v1844 = vperm.slane %v1838, %v1843
        %v1846 = vunpack.c.l.s4 1983009808
        %v1847 = vunpack.c.0.s8 %v1846
        %v1848 = vperm.slane %v1840, %v1847
        %v1849 = vrot.slane %v1844, 4
        %v1850 = vsel %vm545, %v1849, %v1832
        %v1851 = vrot.slane %v1832, 4
        %v1852 = vsel %vm545, %v1844, %v1851
        %v1854 = vunpack.c.l.s4 1934713408
        %v1855 = vunpack.c.0.s8 %v1854
        %v1856 = vperm.slane %v1850, %v1855
        %v1858 = vunpack.c.l.s4 1934713408
        %v1859 = vunpack.c.0.s8 %v1858
        %v1860 = vperm.slane %v1852, %v1859
        %v1861 = vrot.slane %v1848, 4
        %v1862 = vsel %vm545, %v1861, %v1836
        %v1863 = vrot.slane %v1836, 4
        %v1864 = vsel %vm545, %v1848, %v1863
        %v1866 = vunpack.c.l.s4 1934713408
        %v1867 = vunpack.c.0.s8 %v1866
        %v1868 = vperm.slane %v1862, %v1867
        %v1870 = vunpack.c.l.s4 1934713408
        %v1871 = vunpack.c.0.s8 %v1870
        %v1872 = vperm.slane %v1864, %v1871
        %v1873 = vrot.slane %v1856, 4
        %v1874 = vsel %vm545, 0.0, %v1873
        %v1875 = vrot.slane %v1860, 4
        %v1876 = vsel %vm545, 0.0, %v1875
        %v1877 = vrot.slane %v1868, 4
        %v1878 = vsel %vm545, 0.0, %v1877
        %v1879 = vrot.slane %v1872, 4
        %v1880 = vsel %vm545, 0.0, %v1879
        %v1881 = vsel %vm545, %v1819, %v1800
        %v1883 = vunpack.c.l.s4 1983009808
        %v1884 = vunpack.c.0.s8 %v1883
        %v1885 = vperm.slane %v1881, %v1884
        %v1886 = vrot.slane %v1820, 4
        %v1887 = vsel %vm545, %v1886, %v1818
        %v1889 = vunpack.c.l.s4 1983009808
        %v1890 = vunpack.c.0.s8 %v1889
        %v1891 = vperm.slane %v1887, %v1890
        %v1892 = vsel %vm545, %v1823, %v1812
        %v1894 = vunpack.c.l.s4 1983009808
        %v1895 = vunpack.c.0.s8 %v1894
        %v1896 = vperm.slane %v1892, %v1895
        %v1897 = vrot.slane %v1824, 4
        %v1898 = vsel %vm545, %v1897, %v1822
        %v1900 = vunpack.c.l.s4 1983009808
        %v1901 = vunpack.c.0.s8 %v1900
        %v1902 = vperm.slane %v1898, %v1901
        %v1903 = vrot.slane %v1891, 4
        %v1904 = vsel %vm545, %v1903, %v1885
        %v1905 = vrot.slane %v1885, 4
        %v1906 = vsel %vm545, %v1891, %v1905
        %v1908 = vunpack.c.l.s4 1934713408
        %v1909 = vunpack.c.0.s8 %v1908
        %v1910 = vperm.slane %v1904, %v1909
        %v1912 = vunpack.c.l.s4 1934713408
        %v1913 = vunpack.c.0.s8 %v1912
        %v1914 = vperm.slane %v1906, %v1913
        %v1915 = vrot.slane %v1902, 4
        %v1916 = vsel %vm545, %v1915, %v1896
        %v1917 = vrot.slane %v1896, 4
        %v1918 = vsel %vm545, %v1902, %v1917
        %v1920 = vunpack.c.l.s4 1934713408
        %v1921 = vunpack.c.0.s8 %v1920
        %v1922 = vperm.slane %v1916, %v1921
        %v1924 = vunpack.c.l.s4 1934713408
        %v1925 = vunpack.c.0.s8 %v1924
        %v1926 = vperm.slane %v1918, %v1925
        %v1927 = vrot.slane %v1922, 4
        %v1928 = vsel %vm545, %v1927, %v1910
        %v1929 = vrot.slane %v1910, 4
        %v1930 = vsel %vm545, %v1922, %v1929
        %v1931 = vrot.slane %v1926, 4
        %v1932 = vsel %vm545, %v1931, %v1914
        %v1933 = vrot.slane %v1914, 4
        %v1934 = vsel %vm545, %v1926, %v1933
        %v1935 = vsel %vm545, %v1875, %v1856
        %v1937 = vunpack.c.l.s4 1983009808
        %v1938 = vunpack.c.0.s8 %v1937
        %v1939 = vperm.slane %v1935, %v1938
        %v1940 = vrot.slane %v1876, 4
        %v1941 = vsel %vm545, %v1940, %v1874
        %v1943 = vunpack.c.l.s4 1983009808
        %v1944 = vunpack.c.0.s8 %v1943
        %v1945 = vperm.slane %v1941, %v1944
        %v1946 = vsel %vm545, %v1879, %v1868
        %v1948 = vunpack.c.l.s4 1983009808
        %v1949 = vunpack.c.0.s8 %v1948
        %v1950 = vperm.slane %v1946, %v1949
        %v1951 = vrot.slane %v1880, 4
        %v1952 = vsel %vm545, %v1951, %v1878
        %v1954 = vunpack.c.l.s4 1983009808
        %v1955 = vunpack.c.0.s8 %v1954
        %v1956 = vperm.slane %v1952, %v1955
        %v1957 = vrot.slane %v1945, 4
        %v1958 = vsel %vm545, %v1957, %v1939
        %v1959 = vrot.slane %v1939, 4
        %v1960 = vsel %vm545, %v1945, %v1959
        %v1962 = vunpack.c.l.s4 1934713408
        %v1963 = vunpack.c.0.s8 %v1962
        %v1964 = vperm.slane %v1958, %v1963
        %v1966 = vunpack.c.l.s4 1934713408
        %v1967 = vunpack.c.0.s8 %v1966
        %v1968 = vperm.slane %v1960, %v1967
        %v1969 = vrot.slane %v1956, 4
        %v1970 = vsel %vm545, %v1969, %v1950
        %v1971 = vrot.slane %v1950, 4
        %v1972 = vsel %vm545, %v1956, %v1971
        %v1974 = vunpack.c.l.s4 1934713408
        %v1975 = vunpack.c.0.s8 %v1974
        %v1976 = vperm.slane %v1970, %v1975
        %v1978 = vunpack.c.l.s4 1934713408
        %v1979 = vunpack.c.0.s8 %v1978
        %v1980 = vperm.slane %v1972, %v1979
        %v1981 = vrot.slane %v1976, 4
        %v1982 = vsel %vm545, %v1981, %v1964
        %v1983 = vrot.slane %v1964, 4
        %v1984 = vsel %vm545, %v1976, %v1983
        %v1985 = vrot.slane %v1980, 4
        %v1986 = vsel %vm545, %v1985, %v1968
        %v1987 = vrot.slane %v1968, 4
        %v1988 = vsel %vm545, %v1980, %v1987
        %v1989 = vpack.c.bf16 %v1928, %v1928
        %v1990 = vpack.c.bf16 %v1982, %v1982
        %v1991 = vpack.c.bf16 %v1930, %v1930
        %v1992 = vpack.c.bf16 %v1984, %v1984
        %v1993 = vpack.c.bf16 %v1932, %v1932
        %v1994 = vpack.c.bf16 %v1986, %v1986
        %v1995 = vpack.c.bf16 %v1934, %v1934
        %v1996 = vpack.c.bf16 %v1988, %v1988
        %v1999 = vunpack.c.l.b16 %v1737
        %v2000 = vunpack.c.l.b16 %v1738
        %v2001 = vpack.c.b16 %v2000, %v1999
        %v2003 = vsel %vm911, %v1493, 0
        %v2006 = vsel %vm911, %v2001, 0
        %2008 = vmatpush.bf16.xpose.msra.mxu0 0
        %2009 = vmatpush.bf16.xpose.msra.mxu0 0
        %2010 = vmatpush.bf16.xpose.msra.mxu0 0
        %2011 = vmatpush.bf16.xpose.msra.mxu0 0
        %2012 = vmatpush.bf16.xpose.msra.mxu0 0
        %2013 = vmatpush.bf16.xpose.msra.mxu0 0
        %2014 = vmatpush.bf16.xpose.msra.mxu0 0
        %2015 = vmatpush.bf16.xpose.msra.mxu0 %v2006
        %2016 = vmatmul.bf16.gmra.mxu0 %v2003
        %v2017 = vpop.f32.mrf.mxu0
        %v2018 = vadd.f32 0.0, %v2017
        %v2019 = vpop.f32.mrf.mxu0
        %2020 = vdwg.mxu0
        %v2023 = vunpack.c.l.b16 %v1739
        %v2024 = vunpack.c.l.b16 %v1740
        %v2025 = vpack.c.b16 %v2024, %v2023
        %v2027 = vsel %vm911, %v1494, 0
        %v2030 = vsel %vm911, %v2025, 0
        %2032 = vmatpush.bf16.xpose.msra.mxu0 0
        %2033 = vmatpush.bf16.xpose.msra.mxu0 0
        %2034 = vmatpush.bf16.xpose.msra.mxu0 0
        %2035 = vmatpush.bf16.xpose.msra.mxu0 0
        %2036 = vmatpush.bf16.xpose.msra.mxu0 0
        %2037 = vmatpush.bf16.xpose.msra.mxu0 0
        %2038 = vmatpush.bf16.xpose.msra.mxu0 0
        %2039 = vmatpush.bf16.xpose.msra.mxu0 %v2030
        %2040 = vmatmul.bf16.gmra.mxu0 %v2027
        %v2041 = vpop.f32.mrf.mxu0
        %v2042 = vadd.f32 0.0, %v2041
        %v2043 = vpop.f32.mrf.mxu0
        %2044 = vdwg.mxu0
        %v2047 = vunpack.c.l.b16 %v1741
        %v2048 = vunpack.c.l.b16 %v1742
        %v2049 = vpack.c.b16 %v2048, %v2047
        %v2051 = vsel %vm911, %v1495, 0
        %v2054 = vsel %vm911, %v2049, 0
        %2056 = vmatpush.bf16.xpose.msra.mxu0 0
        %2057 = vmatpush.bf16.xpose.msra.mxu0 0
        %2058 = vmatpush.bf16.xpose.msra.mxu0 0
        %2059 = vmatpush.bf16.xpose.msra.mxu0 0
        %2060 = vmatpush.bf16.xpose.msra.mxu0 0
        %2061 = vmatpush.bf16.xpose.msra.mxu0 0
        %2062 = vmatpush.bf16.xpose.msra.mxu0 0
        %2063 = vmatpush.bf16.xpose.msra.mxu0 %v2054
        %2064 = vmatmul.bf16.gmra.mxu0 %v2051
        %v2065 = vpop.f32.mrf.mxu0
        %v2066 = vadd.f32 0.0, %v2065
        %v2067 = vpop.f32.mrf.mxu0
        %2068 = vdwg.mxu0
        %v2071 = vunpack.c.l.b16 %v1743
        %v2072 = vunpack.c.l.b16 %v1744
        %v2073 = vpack.c.b16 %v2072, %v2071
        %v2075 = vsel %vm911, %v1496, 0
        %v2078 = vsel %vm911, %v2073, 0
        %2080 = vmatpush.bf16.xpose.msra.mxu0 0
        %2081 = vmatpush.bf16.xpose.msra.mxu0 0
        %2082 = vmatpush.bf16.xpose.msra.mxu0 0
        %2083 = vmatpush.bf16.xpose.msra.mxu0 0
        %2084 = vmatpush.bf16.xpose.msra.mxu0 0
        %2085 = vmatpush.bf16.xpose.msra.mxu0 0
        %2086 = vmatpush.bf16.xpose.msra.mxu0 0
        %2087 = vmatpush.bf16.xpose.msra.mxu0 %v2078
        %2088 = vmatmul.bf16.gmra.mxu0 %v2075
        %v2089 = vpop.f32.mrf.mxu0
        %v2090 = vadd.f32 0.0, %v2089
        %v2091 = vpop.f32.mrf.mxu0
        %2092 = vdwg.mxu0
        %v2093 = vsel %vm1236, %v2018, -inf
        %2094 = vmax.xlane.f32.xlu0 %v2093
        %v2095 = vpop.xlane.xlu0 %2094
        %v2096 = vsel %vm1236, %v2042, -inf
        %2097 = vmax.xlane.f32.xlu0 %v2096
        %v2098 = vpop.xlane.xlu0 %2097
        %v2099 = vsel %vm1236, %v2066, -inf
        %2100 = vmax.xlane.f32.xlu0 %v2099
        %v2101 = vpop.xlane.xlu0 %2100
        %v2102 = vsel %vm1236, %v2090, -inf
        %2103 = vmax.xlane.f32.xlu0 %v2102
        %v2104 = vpop.xlane.xlu0 %2103
        %v2105 = vsub.f32 %v2018, %v2095
        %v2106 = vsub.f32 %v2042, %v2098
        %v2107 = vsub.f32 %v2066, %v2101
        %v2108 = vsub.f32 %v2090, %v2104
        %v2109 = vmul.f32 %v2105, 1.442695
        %v2110 = vpow.pop %v2109
        %v2111 = vmul.f32 %v2106, 1.442695
        %v2112 = vpow.pop %v2111
        %v2113 = vmul.f32 %v2107, 1.442695
        %v2114 = vpow.pop %v2113
        %v2115 = vmul.f32 %v2108, 1.442695
        %v2116 = vpow.pop %v2115
        %v2117 = vsel %vm1236, %v2110, 0.0
        %2118 = vadd.xlane.f32.xlu0 %v2117
        %v2119 = vpop.xlane.xlu0 %2118
        %v2120 = vsel %vm1236, %v2112, 0.0
        %2121 = vadd.xlane.f32.xlu0 %v2120
        %v2122 = vpop.xlane.xlu0 %2121
        %v2123 = vsel %vm1236, %v2114, 0.0
        %2124 = vadd.xlane.f32.xlu0 %v2123
        %v2125 = vpop.xlane.xlu0 %2124
        %v2126 = vsel %vm1236, %v2116, 0.0
        %2127 = vadd.xlane.f32.xlu0 %v2126
        %v2128 = vpop.xlane.xlu0 %2127
        %v2129 = vrcp.pop %v2119
        %v2130 = vmul.f32 %v2119, %v2129
        %v2131 = vsub.f32 1.0, %v2130
        %v2132 = vmul.f32 %v2129, %v2131
        %v2133 = vadd.f32 %v2129, %v2132
        %vm2134 = vweird.f32 %v2119
        %vm2135 = vweird.f32 %v2129
        %vm2136 = vmor %vm2134, %vm2135
        %v2137 = vsel %vm2136, %v2129, %v2133
        %v2138 = vand.u32 2147483647, %v2119
        %vm2139 = vcmp.eq.f32.partialorder %v2138, 8.507059e+37
        %v2140 = vand.u32 %v2119, 2147483648
        %v2141 = vor.u32 1.1754944e-38, %v2140
        %v2142 = vsel %vm2139, %v2141, %v2137
        %v2143 = vmul.f32 %v2110, %v2142
        %v2144 = vrcp.pop %v2122
        %v2145 = vmul.f32 %v2122, %v2144
        %v2146 = vsub.f32 1.0, %v2145
        %v2147 = vmul.f32 %v2144, %v2146
        %v2148 = vadd.f32 %v2144, %v2147
        %vm2149 = vweird.f32 %v2122
        %vm2150 = vweird.f32 %v2144
        %vm2151 = vmor %vm2149, %vm2150
        %v2152 = vsel %vm2151, %v2144, %v2148
        %v2153 = vand.u32 2147483647, %v2122
        %vm2154 = vcmp.eq.f32.partialorder %v2153, 8.507059e+37
        %v2155 = vand.u32 %v2122, 2147483648
        %v2156 = vor.u32 1.1754944e-38, %v2155
        %v2157 = vsel %vm2154, %v2156, %v2152
        %v2158 = vmul.f32 %v2112, %v2157
        %v2159 = vrcp.pop %v2125
        %v2160 = vmul.f32 %v2125, %v2159
        %v2161 = vsub.f32 1.0, %v2160
        %v2162 = vmul.f32 %v2159, %v2161
        %v2163 = vadd.f32 %v2159, %v2162
        %vm2164 = vweird.f32 %v2125
        %vm2165 = vweird.f32 %v2159
        %vm2166 = vmor %vm2164, %vm2165
        %v2167 = vsel %vm2166, %v2159, %v2163
        %v2168 = vand.u32 2147483647, %v2125
        %vm2169 = vcmp.eq.f32.partialorder %v2168, 8.507059e+37
        %v2170 = vand.u32 %v2125, 2147483648
        %v2171 = vor.u32 1.1754944e-38, %v2170
        %v2172 = vsel %vm2169, %v2171, %v2167
        %v2173 = vmul.f32 %v2114, %v2172
        %v2174 = vrcp.pop %v2128
        %v2175 = vmul.f32 %v2128, %v2174
        %v2176 = vsub.f32 1.0, %v2175
        %v2177 = vmul.f32 %v2174, %v2176
        %v2178 = vadd.f32 %v2174, %v2177
        %vm2179 = vweird.f32 %v2128
        %vm2180 = vweird.f32 %v2174
        %vm2181 = vmor %vm2179, %vm2180
        %v2182 = vsel %vm2181, %v2174, %v2178
        %v2183 = vand.u32 2147483647, %v2128
        %vm2184 = vcmp.eq.f32.partialorder %v2183, 8.507059e+37
        %v2185 = vand.u32 %v2128, 2147483648
        %v2186 = vor.u32 1.1754944e-38, %v2185
        %v2187 = vsel %vm2184, %v2186, %v2182
        %v2188 = vmul.f32 %v2116, %v2187
        %v2189 = vpack.c.bf16 %v2143, %v2143
        %v2190 = vpack.c.bf16 %v2158, %v2158
        %v2191 = vpack.c.bf16 %v2173, %v2173
        %v2192 = vpack.c.bf16 %v2188, %v2188
        %v2195 = vunpack.c.l.b16 %v1989
        %v2196 = vunpack.c.l.b16 %v1990
        %v2197 = vpack.c.b16 %v2196, %v2195
        %v2200 = vsel %vm1236, %v2189, 0
        %2202 = vmatpush.bf16.msra.mxu0 0
        %2203 = vmatpush.bf16.msra.mxu0 0
        %2204 = vmatpush.bf16.msra.mxu0 0
        %2205 = vmatpush.bf16.msra.mxu0 0
        %2206 = vmatpush.bf16.msra.mxu0 0
        %2207 = vmatpush.bf16.msra.mxu0 0
        %2208 = vmatpush.bf16.msra.mxu0 0
        %2209 = vmatpush.bf16.msra.mxu0 %v2197
        %2210 = vmatmul.bf16.gmra.mxu0 %v2200
        %v2211 = vpop.f32.mrf.mxu0
        %v2212 = vadd.f32 0.0, %v2211
        %v2213 = vpop.f32.mrf.mxu0
        %2214 = vdwg.mxu0
        %v2217 = vunpack.c.l.b16 %v1991
        %v2218 = vunpack.c.l.b16 %v1992
        %v2219 = vpack.c.b16 %v2218, %v2217
        %v2222 = vsel %vm1236, %v2190, 0
        %2224 = vmatpush.bf16.msra.mxu0 0
        %2225 = vmatpush.bf16.msra.mxu0 0
        %2226 = vmatpush.bf16.msra.mxu0 0
        %2227 = vmatpush.bf16.msra.mxu0 0
        %2228 = vmatpush.bf16.msra.mxu0 0
        %2229 = vmatpush.bf16.msra.mxu0 0
        %2230 = vmatpush.bf16.msra.mxu0 0
        %2231 = vmatpush.bf16.msra.mxu0 %v2219
        %2232 = vmatmul.bf16.gmra.mxu0 %v2222
        %v2233 = vpop.f32.mrf.mxu0
        %v2234 = vadd.f32 0.0, %v2233
        %v2235 = vpop.f32.mrf.mxu0
        %2236 = vdwg.mxu0
        %v2239 = vunpack.c.l.b16 %v1993
        %v2240 = vunpack.c.l.b16 %v1994
        %v2241 = vpack.c.b16 %v2240, %v2239
        %v2244 = vsel %vm1236, %v2191, 0
        %2246 = vmatpush.bf16.msra.mxu0 0
        %2247 = vmatpush.bf16.msra.mxu0 0
        %2248 = vmatpush.bf16.msra.mxu0 0
        %2249 = vmatpush.bf16.msra.mxu0 0
        %2250 = vmatpush.bf16.msra.mxu0 0
        %2251 = vmatpush.bf16.msra.mxu0 0
        %2252 = vmatpush.bf16.msra.mxu0 0
        %2253 = vmatpush.bf16.msra.mxu0 %v2241
        %2254 = vmatmul.bf16.gmra.mxu0 %v2244
        %v2255 = vpop.f32.mrf.mxu0
        %v2256 = vadd.f32 0.0, %v2255
        %v2257 = vpop.f32.mrf.mxu0
        %2258 = vdwg.mxu0
        %v2261 = vunpack.c.l.b16 %v1995
        %v2262 = vunpack.c.l.b16 %v1996
        %v2263 = vpack.c.b16 %v2262, %v2261
        %v2266 = vsel %vm1236, %v2192, 0
        %2268 = vmatpush.bf16.msra.mxu0 0
        %2269 = vmatpush.bf16.msra.mxu0 0
        %2270 = vmatpush.bf16.msra.mxu0 0
        %2271 = vmatpush.bf16.msra.mxu0 0
        %2272 = vmatpush.bf16.msra.mxu0 0
        %2273 = vmatpush.bf16.msra.mxu0 0
        %2274 = vmatpush.bf16.msra.mxu0 0
        %2275 = vmatpush.bf16.msra.mxu0 %v2263
        %2276 = vmatmul.bf16.gmra.mxu0 %v2266
        %v2277 = vpop.f32.mrf.mxu0
        %v2278 = vadd.f32 0.0, %v2277
        %v2279 = vpop.f32.mrf.mxu0
        %2280 = vdwg.mxu0
        %v2281 = vrot.slane %v2256, 4
        %v2282 = vsel %vm545, %v2281, %v2212
        %v2283 = vrot.slane %v2212, 4
        %v2284 = vsel %vm545, %v2256, %v2283
        %v2286 = vunpack.c.l.s4 1983009808
        %v2287 = vunpack.c.0.s8 %v2286
        %v2288 = vperm.slane %v2282, %v2287
        %v2290 = vunpack.c.l.s4 1983009808
        %v2291 = vunpack.c.0.s8 %v2290
        %v2292 = vperm.slane %v2284, %v2291
        %v2293 = vrot.slane %v2278, 4
        %v2294 = vsel %vm545, %v2293, %v2234
        %v2295 = vrot.slane %v2234, 4
        %v2296 = vsel %vm545, %v2278, %v2295
        %v2298 = vunpack.c.l.s4 1983009808
        %v2299 = vunpack.c.0.s8 %v2298
        %v2300 = vperm.slane %v2294, %v2299
        %v2302 = vunpack.c.l.s4 1983009808
        %v2303 = vunpack.c.0.s8 %v2302
        %v2304 = vperm.slane %v2296, %v2303
        %v2305 = vrot.slane %v2300, 4
        %v2306 = vsel %vm545, %v2305, %v2288
        %v2307 = vrot.slane %v2288, 4
        %v2308 = vsel %vm545, %v2300, %v2307
        %v2310 = vunpack.c.l.s4 1934713408
        %v2311 = vunpack.c.0.s8 %v2310
        %v2312 = vperm.slane %v2306, %v2311
        %v2314 = vunpack.c.l.s4 1934713408
        %v2315 = vunpack.c.0.s8 %v2314
        %v2316 = vperm.slane %v2308, %v2315
        %v2317 = vrot.slane %v2304, 4
        %v2318 = vsel %vm545, %v2317, %v2292
        %v2319 = vrot.slane %v2292, 4
        %v2320 = vsel %vm545, %v2304, %v2319
        %v2322 = vunpack.c.l.s4 1934713408
        %v2323 = vunpack.c.0.s8 %v2322
        %v2324 = vperm.slane %v2318, %v2323
        %v2326 = vunpack.c.l.s4 1934713408
        %v2327 = vunpack.c.0.s8 %v2326
        %v2328 = vperm.slane %v2320, %v2327
        %v2329 = vrot.slane %v2312, 4
        %v2330 = vsel %vm545, 0.0, %v2329
        %v2331 = vrot.slane %v2316, 4
        %v2332 = vsel %vm545, 0.0, %v2331
        %v2333 = vrot.slane %v2324, 4
        %v2334 = vsel %vm545, 0.0, %v2333
        %v2335 = vrot.slane %v2328, 4
        %v2336 = vsel %vm545, 0.0, %v2335
        %v2337 = vsel %vm545, %v2331, %v2312
        %v2339 = vunpack.c.l.s4 1983009808
        %v2340 = vunpack.c.0.s8 %v2339
        %v2341 = vperm.slane %v2337, %v2340
        %v2342 = vrot.slane %v2332, 4
        %v2343 = vsel %vm545, %v2342, %v2330
        %v2345 = vunpack.c.l.s4 1983009808
        %v2346 = vunpack.c.0.s8 %v2345
        %v2347 = vperm.slane %v2343, %v2346
        %v2348 = vsel %vm545, %v2335, %v2324
        %v2350 = vunpack.c.l.s4 1983009808
        %v2351 = vunpack.c.0.s8 %v2350
        %v2352 = vperm.slane %v2348, %v2351
        %v2353 = vrot.slane %v2336, 4
        %v2354 = vsel %vm545, %v2353, %v2334
        %v2356 = vunpack.c.l.s4 1983009808
        %v2357 = vunpack.c.0.s8 %v2356
        %v2358 = vperm.slane %v2354, %v2357
        %v2359 = vrot.slane %v2347, 4
        %v2360 = vsel %vm545, %v2359, %v2341
        %v2361 = vrot.slane %v2341, 4
        %v2362 = vsel %vm545, %v2347, %v2361
        %v2364 = vunpack.c.l.s4 1934713408
        %v2365 = vunpack.c.0.s8 %v2364
        %v2366 = vperm.slane %v2360, %v2365
        %v2368 = vunpack.c.l.s4 1934713408
        %v2369 = vunpack.c.0.s8 %v2368
        %v2370 = vperm.slane %v2362, %v2369
        %v2371 = vrot.slane %v2358, 4
        %v2372 = vsel %vm545, %v2371, %v2352
        %v2373 = vrot.slane %v2352, 4
        %v2374 = vsel %vm545, %v2358, %v2373
        %v2376 = vunpack.c.l.s4 1934713408
        %v2377 = vunpack.c.0.s8 %v2376
        %v2378 = vperm.slane %v2372, %v2377
        %v2380 = vunpack.c.l.s4 1934713408
        %v2381 = vunpack.c.0.s8 %v2380
        %v2382 = vperm.slane %v2374, %v2381
        %v2383 = vrot.slane %v2378, 4
        %v2384 = vsel %vm545, %v2383, %v2366
        %v2385 = vrot.slane %v2366, 4
        %v2386 = vsel %vm545, %v2378, %v2385
        %v2387 = vrot.slane %v2382, 4
        %v2388 = vsel %vm545, %v2387, %v2370
        %v2389 = vrot.slane %v2370, 4
        %v2390 = vsel %vm545, %v2382, %v2389
        %2392 = vrot.lane.b32.xlu0 %v2386, 8
        %v2393 = vpop.permute.xlu0 %2392
        %2396 = vrot.lane.b32.xlu0 %v2388, 16
        %v2397 = vpop.permute.xlu0 %2396
        %2400 = vrot.lane.b32.xlu0 %v2390, 24
        %v2401 = vpop.permute.xlu0 %2400
        %v2403 = vsel %vm911, %v2384, %v2393
        %v2404 = vsel %vm1236, %v2403, %v2397
        %v2405 = vsel %vm1238, %v2404, %v2401
        %v2406 = vpack.c.bf16 %v2405, %v2405
        %2407 = vrot.lane.b32.xlu0 %v1316, 32
        %v2408 = vpop.permute.xlu0 %2407
        %2409 = vrot.lane.b32.xlu0 %v1317, 32
        %v2410 = vpop.permute.xlu0 %2409
        %v2414 = vsel %vm513, %v2406, 0
        %2416 = vmatpush.bf16.msra.mxu0 0
        %2417 = vmatpush.bf16.msra.mxu0 0
        %2418 = vmatpush.bf16.msra.mxu0 0
        %2419 = vmatpush.bf16.msra.mxu0 0
        %2420 = vmatpush.bf16.msra.mxu0 0
        %2421 = vmatpush.bf16.msra.mxu0 0
        %2422 = vmatpush.bf16.msra.mxu0 %v2410
        %2423 = vmatpush.bf16.msra.mxu0 %v2408
        %2424 = vmatmul.bf16.gmra.mxu0 %v2414
        %v2425 = vpop.f32.mrf.mxu0
        %v2426 = vadd.f32 0.0, %v2425
        %v2427 = vpop.f32.mrf.mxu0
        %2428 = vdwg.mxu0
        %2429 = vrot.lane.b32.xlu0 %v1337, 32
        %v2430 = vpop.permute.xlu0 %2429
        %v2432 = vadd.f32 %v2426, %v2430
        %v2433 = vadd.f32 %v1306, %v2432
        %v2434 = vsel %vm513, %v2433, 0.0
        %2435 = vadd.xlane.f32.xlu0 %v2434
        %v2436 = vpop.xlane.xlu0 %2435
        %v2437 = vmul.f32 %v2436, %v1277
        %v2438 = vsub.f32 %v2433, %v2437
        %v2439 = vmul.f32 %v2438, %v2438
        %v2440 = vsel %vm513, %v2439, 0.0
        %2441 = vadd.xlane.f32.xlu0 %v2440
        %v2442 = vpop.xlane.xlu0 %2441
        %v2443 = vmul.f32 %v2442, %v1277
        %v2444 = vadd.f32 %v2443, 1e-05
        %v2445 = vrsqrt.pop %v2444
        %v2446 = vmul.f32 %v2445, %v2444
        %v2447 = vmul.f32 %v2446, %v2445
        %v2448 = vmul.f32 0.5, %v2447
        %v2449 = vsub.f32 1.5, %v2448
        %v2450 = vmul.f32 %v2445, %v2449
        %vm2451 = vweird.f32 %v2444
        %vm2452 = vweird.f32 %v2445
        %vm2453 = vmor %vm2451, %vm2452
        %v2454 = vsel %vm2453, %v2445, %v2450
        %v2455 = vmul.f32 %v2438, %v2454
        %2456 = vrot.lane.b32.xlu0 %v1304, 96
        %v2457 = vpop.permute.xlu0 %2456
        %v2459 = vmul.f32 %v2455, %v2457
        %2460 = vrot.lane.b32.xlu0 %v1304, 64
        %v2461 = vpop.permute.xlu0 %2460
        %v2463 = vadd.f32 %v2459, %v2461
        %v2464 = vpack.c.bf16 %v2463, %v2463
        %v2469 = vunpack.c.l.b16 %v483
        %v2470 = vunpack.c.l.b16 %v484
        %v2471 = vunpack.c.l.b16 %v485
        %v2472 = vunpack.c.l.b16 %v486
        %v2473 = vpack.c.b16 %v2470, %v2469
        %v2474 = vpack.c.b16 %v2472, %v2471
        %v2478 = vsel %vm513, %v2464, 0
        %2480 = vmatpush.bf16.msra.mxu0 0
        %2481 = vmatpush.bf16.msra.mxu0 0
        %2482 = vmatpush.bf16.msra.mxu0 0
        %2483 = vmatpush.bf16.msra.mxu0 0
        %2484 = vmatpush.bf16.msra.mxu0 0
        %2485 = vmatpush.bf16.msra.mxu0 0
        %2486 = vmatpush.bf16.msra.mxu0 %v2474
        %2487 = vmatpush.bf16.msra.mxu0 %v2473
        %2488 = vmatmul.bf16.gmra.mxu0 %v2478
        %v2489 = vpop.f32.mrf.mxu0
        %v2490 = vadd.f32 0.0, %v2489
        %v2491 = vpop.f32.mrf.mxu0
        %2492 = vdwg.mxu0
        %v2494 = vadd.f32 %v2490, %v1298
        %v2495 = vmax.f32 %v2494, 0.0
        %v2496 = vpack.c.bf16 %v2495, %v2495
        %v2505 = vunpack.c.l.b16 %v487
        %v2506 = vunpack.c.l.b16 %v488
        %v2507 = vunpack.c.l.b16 %v489
        %v2508 = vunpack.c.l.b16 %v490
        %v2509 = vunpack.c.l.b16 %v491
        %v2510 = vunpack.c.l.b16 %v492
        %v2511 = vunpack.c.l.b16 %v493
        %v2512 = vunpack.c.l.b16 %v494
        %v2513 = vpack.c.b16 %v2506, %v2505
        %v2514 = vpack.c.b16 %v2508, %v2507
        %v2515 = vpack.c.b16 %v2510, %v2509
        %v2516 = vpack.c.b16 %v2512, %v2511
        %vm2521 = vcmask 523264
        %v2523 = vsel %vm2521, %v2496, 0
        %2525 = vmatpush.bf16.msra.mxu0 0
        %2526 = vmatpush.bf16.msra.mxu0 0
        %2527 = vmatpush.bf16.msra.mxu0 0
        %2528 = vmatpush.bf16.msra.mxu0 0
        %2529 = vmatpush.bf16.msra.mxu0 %v2516
        %2530 = vmatpush.bf16.msra.mxu0 %v2515
        %2531 = vmatpush.bf16.msra.mxu0 %v2514
        %2532 = vmatpush.bf16.msra.mxu0 %v2513
        %2533 = vmatmul.bf16.gmra.mxu0 %v2523
        %v2534 = vpop.f32.mrf.mxu0
        %v2535 = vadd.f32 0.0, %v2534
        %v2536 = vpop.f32.mrf.mxu0
        %2537 = vdwg.mxu0
        %2538 = vrot.lane.b32.xlu0 %v1298, 64
        %v2539 = vpop.permute.xlu0 %2538
        %v2541 = vadd.f32 %v2535, %v2539
        %v2542 = vadd.f32 %v2463, %v2541
        %v2543 = vsel %vm513, %v2542, 0.0
        %2544 = vadd.xlane.f32.xlu0 %v2543
        %v2545 = vpop.xlane.xlu0 %2544
        %v2546 = vmul.f32 %v2545, %v1277
        %v2547 = vsub.f32 %v2542, %v2546
        %v2548 = vmul.f32 %v2547, %v2547
        %v2549 = vsel %vm513, %v2548, 0.0
        %2550 = vadd.xlane.f32.xlu0 %v2549
        %v2551 = vpop.xlane.xlu0 %2550
        %v2552 = vmul.f32 %v2551, %v1277
        %v2553 = vadd.f32 %v2552, 1e-05
        %v2554 = vrsqrt.pop %v2553
        %v2555 = vmul.f32 %v2554, %v2553
        %v2556 = vmul.f32 %v2555, %v2554
        %v2557 = vmul.f32 0.5, %v2556
        %v2558 = vsub.f32 1.5, %v2557
        %v2559 = vmul.f32 %v2554, %v2558
        %vm2560 = vweird.f32 %v2553
        %vm2561 = vweird.f32 %v2554
        %vm2562 = vmor %vm2560, %vm2561
        %v2563 = vsel %vm2562, %v2554, %v2559
        %v2564 = vmul.f32 %v2547, %v2563
        %2565 = vrot.lane.b32.xlu0 %v1304, 32
        %v2566 = vpop.permute.xlu0 %2565
        %v2568 = vmul.f32 %v2564, %v2566
        %v2570 = vperm.slane %v499, 0
        %v2572 = vadd.f32 %v2568, %v2570
        %p2573 = scmp.lt.s32.totalorder %s37, 1
        // Predicated region
        $region65: #{tpu_custom_call.1} parent=47 // pred_check
          %p2574 = pneg %p2573
        $region66: #{tpu_custom_call.1} parent=47 // pred_check_branch
          %2576 = sbr.rel (%p2574) target = $region68
        $region67: #{tpu_custom_call.1} parent=47 // pred_region
          %2577 = vst.msk [vmem:[%s446] sm:$0xff] %vm513, %v2572
        $region68: #{tpu_custom_call.1} parent=47 // pred_fallthru
          _
        %p2578 = scmp.eq.s32.totalorder %s37, 1
        // Predicated region
        $region69: #{tpu_custom_call.1} parent=47 // pred_check
          %p2579 = pneg %p2578
        $region70: #{tpu_custom_call.1} parent=47 // pred_check_branch
          %2581 = sbr.rel (%p2579) target = $region72
        $region71: #{tpu_custom_call.1} parent=47 // pred_region
          %v2582 = vld [vmem:[%s5] sm:$0x1]
          %v2583 = vld [vmem:[%s6] sm:$0x1]
          %v2584 = vsel %vm513, %v2572, 0.0
          %2585 = vadd.xlane.f32.xlu0 %v2584
          %v2586 = vpop.xlane.xlu0 %2585
          %v2587 = vmul.f32 %v2586, %v1277
          %v2588 = vsub.f32 %v2572, %v2587
          %v2589 = vmul.f32 %v2588, %v2588
          %v2590 = vsel %vm513, %v2589, 0.0
          %2591 = vadd.xlane.f32.xlu0 %v2590
          %v2592 = vpop.xlane.xlu0 %2591
          %v2593 = vmul.f32 %v2592, %v1277
          %v2594 = vadd.f32 %v2593, 1e-05
          %v2595 = vrsqrt.pop %v2594
          %v2596 = vmul.f32 %v2595, %v2594
          %v2597 = vmul.f32 %v2596, %v2595
          %v2598 = vmul.f32 0.5, %v2597
          %v2599 = vsub.f32 1.5, %v2598
          %v2600 = vmul.f32 %v2595, %v2599
          %vm2601 = vweird.f32 %v2594
          %vm2602 = vweird.f32 %v2595
          %vm2603 = vmor %vm2601, %vm2602
          %v2604 = vsel %vm2603, %v2595, %v2600
          %v2605 = vmul.f32 %v2588, %v2604
          %v2607 = vperm.slane %v2582, 0
          %v2609 = vmul.f32 %v2605, %v2607
          %v2611 = vperm.slane %v2583, 0
          %v2613 = vadd.f32 %v2609, %v2611
          %2614 = vst.msk [vmem:[%s446] sm:$0xff] %vm513, %v2613
          %v2615 = vsel %vm1236, %v2143, 0.0
          %v2616 = vsel %vm1236, %v2158, 0.0
          %v2617 = vadd.f32 %v2615, %v2616
          %v2618 = vsel %vm1236, %v2173, 0.0
          %v2619 = vadd.f32 %v2617, %v2618
          %v2620 = vsel %vm1236, %v2188, 0.0
          %v2621 = vadd.f32 %v2619, %v2620
          %v2622 = vmul.f32 %v2621, 0.25
          %2623 = vst.msk [vmem:[%s453] sm:$0xff] %vm1236, %v2622
        $region72: #{tpu_custom_call.1} parent=47 // pred_fallthru
          _
        %s2624 = sand.u32 %s224, 1
        %s2625 = scalar_lea.sflag [#allocation4], %s2624
        %s2626 = sand.u32 %s224, 1
        %s2627 = smul.addr %s2626, 8
        %s2628 = scalar_lea.vmem [#allocation8], %s2627
        %s2629 = sand.u32 %s250, 1
        %s2630 = scalar_lea.sflag [#allocation10], %s2629
        %s2631 = sand.u32 %s250, 1
        %s2632 = smul.addr %s2631, 8
        %s2633 = scalar_lea.vmem [#allocation9], %s2632
        // Predicated region
        $region73: #{tpu_custom_call.1} parent=47 // pred_check
          %p2634 = pneg %p234
        $region74: #{tpu_custom_call.1} parent=47 // pred_check_branch
          %2636 = sbr.rel (%p2634) target = $region76
        $region75: #{tpu_custom_call.1} parent=47 // pred_region
          %2638 = vsyncadd %s2625, 0
          %s2639 = smul.addr %s36, 8
          %s2640 = scalar_lea.hbm %s7, %s2639
          %s2642 = sshll.u32 %s2628, 4
          %s2643 = int_to_ptr.vmem [resolvable:$true] %s2642
          %s2644 = sshll.u32 %s2640, 4
          %s2645 = int_to_ptr.hbm [resolvable:$true] %s2644
          %2647 = dma.vmem_to_hbm [thread:$0]  %s2643, 128, %s2645, %s2625
        $region76: #{tpu_custom_call.1} parent=47 // pred_fallthru
          _
        // Predicated region
        $region77: #{tpu_custom_call.1} parent=47 // pred_check
          %p2648 = pneg %p260
        $region78: #{tpu_custom_call.1} parent=47 // pred_check_branch
          %2650 = sbr.rel (%p2648) target = $region80
        $region79: #{tpu_custom_call.1} parent=47 // pred_region
          %2652 = vsyncadd %s2630, 0
          %s2653 = smul.addr %s36, 8
          %s2654 = scalar_lea.hbm %s8, %s2653
          %s2656 = sshll.u32 %s2633, 4
          %s2657 = int_to_ptr.vmem [resolvable:$true] %s2656
          %s2658 = sshll.u32 %s2654, 4
          %s2659 = int_to_ptr.hbm [resolvable:$true] %s2658
          %2661 = dma.vmem_to_hbm [thread:$0]  %s2657, 128, %s2659, %s2630
        $region80: #{tpu_custom_call.1} parent=47 // pred_fallthru
          _
      $region48: #{tpu_custom_call.1} parent=5 // pred_fallthru
        _
      %p2662 = scmp.le.s32.totalorder 2, %s27
      // Predicated region
      $region81: #{tpu_custom_call.1} parent=5 // pred_check
        %p2663 = pneg %p2662
      $region82: #{tpu_custom_call.1} parent=5 // pred_check_branch
        %2665 = sbr.rel (%p2663) target = $region84
      $region83: #{tpu_custom_call.1} parent=5 // pred_region
        %s2666 = ssub.s32 %s27, 2
        // Predicated region
        $region85: #{tpu_custom_call.1} parent=83 // pred_check
          %p2667 = pneg %p240
        $region86: #{tpu_custom_call.1} parent=83 // pred_check_branch
          %2669 = sbr.rel (%p2667) target = $region88
        $region87: #{tpu_custom_call.1} parent=83 // pred_region
          %s2670 = sand.u32 %s225, 1
          %s2671 = scalar_lea.sflag [#allocation4], %s2670
          %s2672 = sand.u32 %s225, 1
          %s2673 = smul.addr %s2672, 8
          %s2674 = scalar_lea.vmem [#allocation8], %s2673
          %2676 = dma.done %s2671, 128
        $region88: #{tpu_custom_call.1} parent=83 // pred_fallthru
          _
        // Predicated region
        $region89: #{tpu_custom_call.1} parent=83 // pred_check
          %p2677 = pneg %p266
        $region90: #{tpu_custom_call.1} parent=83 // pred_check_branch
          %2679 = sbr.rel (%p2677) target = $region92
        $region91: #{tpu_custom_call.1} parent=83 // pred_region
          %s2680 = sand.u32 %s251, 1
          %s2681 = scalar_lea.sflag [#allocation10], %s2680
          %s2682 = sand.u32 %s251, 1
          %s2683 = smul.addr %s2682, 8
          %s2684 = scalar_lea.vmem [#allocation9], %s2683
          %2686 = dma.done %s2681, 128
        $region92: #{tpu_custom_call.1} parent=83 // pred_fallthru
          _
      $region84: #{tpu_custom_call.1} parent=5 // pred_fallthru
        _
    $region6: #{tpu_custom_call.1} parent=1 // loop_footer
      %s31 = sadd.s32 1, %s27
    $region7: #{tpu_custom_call.1} parent=1 // loop_footer_branch
      %26 = sbr.rel target = $region3
    $region8: #{tpu_custom_call.1} parent=1 // loop_exit
      _
    %2687 = vsyncpa [#allocation3], 1
    %s2688 = scalar_lea.sflag [#allocation3], 1
    %2689 = vsyncpa %s2688, 1
    %2690 = vsyncpa [#allocation6], 1
    %s2691 = scalar_lea.sflag [#allocation6], 1
    %2692 = vsyncpa %s2691, 1
    %2693 = vsyncpa [#allocation4], 1
    %s2694 = scalar_lea.sflag [#allocation4], 1
    %2695 = vsyncpa %s2694, 1
    %2696 = vsyncpa [#allocation10], 1
    %s2697 = scalar_lea.sflag [#allocation10], 1
    %2698 = vsyncpa %s2697, 1

</llo_original>
